<compile_context>
chip_gen: v7x
topology: tpu7x:2x2x1
jax: 0.10.0
libtpu: 0.0.40
codegen_flags: <defaults>
</compile_context>

<pallas_src>
import jax
import jax.numpy as jnp
from jax.experimental import pallas as pl
from jax.experimental.pallas import tpu as pltpu

LATENT_DIMS = 2
HIDDEN = 512
OUT_FEATS = 784          # 1 * 28 * 28


def _decoder_kernel(z_ref, w1_ref, b1_ref, w2_ref, b2_ref, out_ref):
    z = z_ref[...]                                           # (TB, 2) f32

    # ---- Linear(2 -> 512) + ReLU on the VPU (K=2 would waste an MXU pass).
    h = (z[:, 0:1] * w1_ref[0:1, :]
         + z[:, 1:2] * w1_ref[1:2, :]
         + b1_ref[...])
    h = jnp.maximum(h, 0.0)                                  # (TB, 512) f32

    # ---- Linear(512 -> 784) on the MXU: bf16 in, f32 accumulate.
    logits = jnp.dot(h.astype(jnp.bfloat16), w2_ref[...],
                     preferred_element_type=jnp.float32) + b2_ref[...]

    # sigmoid(x) == 0.5 * (tanh(x/2) + 1): single EUP transcendental
    # (instead of exp + divide), math kept in f32 (v5e-safe).
    out_ref[...] = 0.5 * (jnp.tanh(0.5 * logits) + 1.0)      # (TB, 784) f32


def pack_params(params):
    """One-time packing: cast the big streamed weight to bf16; biases and the
    tiny first-layer weight stay f32.  No lane padding (kernel writes 784)."""
    w1, b1, w2, b2 = params
    return (w1,
            b1.reshape(1, HIDDEN),
            w2.astype(jnp.bfloat16),
            b2.reshape(1, OUT_FEATS))


def _choose_tb(B):
    """Batch tile: whole batch when small; otherwise 256-512 rows (multiple of
    8) with >= 2 grid steps so v7x's two TensorCores both get work."""
    if B <= 256:
        return B
    half = -(-B // 2)                 # ceil(B / 2)
    tb = -(-half // 8) * 8            # round up to a multiple of 8
    return min(512, tb)


def decoder_forward(z, packed_params):
    """z: (B, LATENT_DIMS) float32 -> (B, 1, 28, 28) float32."""
    w1, b1, w2, b2 = packed_params
    B = z.shape[0]

    TB = _choose_tb(B)
    grid = (pl.cdiv(B, TB),)

    cost = pl.CostEstimate(
        flops=2 * B * (LATENT_DIMS * HIDDEN + HIDDEN * OUT_FEATS),
        transcendentals=B * OUT_FEATS,
        bytes_accessed=(z.size * 4                    # z read
                        + w1.size * 4 + b1.size * 4   # layer-1 params
                        + w2.size * 2 + b2.size * 4   # layer-2 params (w2 bf16)
                        + B * OUT_FEATS * 4),         # output write
    )

    out = pl.pallas_call(
        _decoder_kernel,
        grid=grid,
        in_specs=[
            pl.BlockSpec((TB, LATENT_DIMS), lambda i: (i, 0)),       # z tile
            pl.BlockSpec((LATENT_DIMS, HIDDEN), lambda i: (0, 0)),   # w1 (resident)
            pl.BlockSpec((1, HIDDEN), lambda i: (0, 0)),             # b1 (resident)
            pl.BlockSpec((HIDDEN, OUT_FEATS), lambda i: (0, 0)),     # w2 bf16 (resident)
            pl.BlockSpec((1, OUT_FEATS), lambda i: (0, 0)),          # b2 (resident)
        ],
        out_specs=pl.BlockSpec((TB, OUT_FEATS), lambda i: (i, 0)),
        out_shape=jax.ShapeDtypeStruct((B, OUT_FEATS), jnp.float32),
        compiler_params=pltpu.CompilerParams(
            dimension_semantics=("parallel",)),   # v7x: 2 TCs split the batch
        cost_estimate=cost,
    )(z, w1, b1, w2, b2)

    # Contiguous (B, 784) -> (B, 1, 28, 28) is a free metadata reshape.
    return out.reshape(B, 1, 28, 28)


def init_params(key):
    """Deterministic init mirroring nn.Linear defaults U[-1/sqrt(fan_in), +]."""
    def linear(k, fan_in, fan_out):
        kw, kb = jax.random.split(k)
        bound = 1.0 / jnp.sqrt(fan_in)
        w = jax.random.uniform(kw, (fan_in, fan_out), jnp.float32, -bound, bound)
        b = jax.random.uniform(kb, (fan_out,), jnp.float32, -bound, bound)
        return w, b

    k1, k2 = jax.random.split(key)
    w1, b1 = linear(k1, LATENT_DIMS, HIDDEN)    # decoder.linear1
    w2, b2 = linear(k2, HIDDEN, OUT_FEATS)      # decoder.linear2
    return w1, b1, w2, b2


if __name__ == "__main__":
    key = jax.random.PRNGKey(0)
    k_params, k_z = jax.random.split(key)

    B = 8
    params = init_params(k_params)
    packed = pack_params(params)
    z = jax.random.normal(k_z, (B, LATENT_DIMS), jnp.float32)

    recon = decoder_forward(z, packed)
    jax.block_until_ready(recon)
    assert recon.shape == (B, 1, 28, 28)

    # Pure-JAX references.
    w1, b1, w2, b2 = params
    h = jnp.maximum(z @ w1 + b1, 0.0)
    ref_f32 = jax.nn.sigmoid(h @ w2 + b2).reshape(B, 1, 28, 28)
    ref_bf16 = jax.nn.sigmoid(
        jnp.dot(h.astype(jnp.bfloat16), w2.astype(jnp.bfloat16),
                preferred_element_type=jnp.float32) + b2
    ).reshape(B, 1, 28, 28)

    # Tight check against the bf16-MXU reference; looser vs the pure-f32 math
    # (bf16 weight streaming is an intentional, reviewed precision trade).
    assert jnp.allclose(recon, ref_bf16, atol=2e-3), "mismatch vs bf16 reference"
    assert jnp.allclose(recon, ref_f32, atol=2e-2), "mismatch vs f32 reference"
    print("KERNEL_OK")
</pallas_src>

<mosaic_0001>
module attributes {stable_mosaic.version = 11 : i64} {
  func.func @_decoder_kernel(%arg0: i32, %arg1: memref<8x2xf32, #tpu.memory_space<vmem>>, %arg2: memref<2x512xf32, #tpu.memory_space<vmem>>, %arg3: memref<1x512xf32, #tpu.memory_space<vmem>>, %arg4: memref<512x784xbf16, #tpu.memory_space<vmem>>, %arg5: memref<1x784xf32, #tpu.memory_space<vmem>>, %arg6: memref<8x784xf32, #tpu.memory_space<vmem>>) attributes {dimension_semantics = [#tpu.dimension_semantics<parallel>], iteration_bounds = array<i64: 1>, scalar_prefetch = 0 : i64, scratch_operands = 0 : i64, tpu.core_type = #tpu.core_type<tc>, window_params = [{transform_indices = @transform_0, window_bounds = array<i64: 8, 2>}, {pipeline_mode = #tpu.pipeline_mode<synchronous>, transform_indices = @transform_1, window_bounds = array<i64: 2, 512>}, {pipeline_mode = #tpu.pipeline_mode<synchronous>, transform_indices = @transform_2, window_bounds = array<i64: 1, 512>}, {pipeline_mode = #tpu.pipeline_mode<synchronous>, transform_indices = @transform_3, window_bounds = array<i64: 512, 784>}, {pipeline_mode = #tpu.pipeline_mode<synchronous>, transform_indices = @transform_4, window_bounds = array<i64: 1, 784>}, {transform_indices = @transform_5, window_bounds = array<i64: 8, 784>}]} {
    %c0 = arith.constant 0 : index
    %c0_0 = arith.constant 0 : index
    %0 = vector.load %arg1[%c0, %c0_0] : memref<8x2xf32, #tpu.memory_space<vmem>>, vector<8x2xf32>
    %1 = vector.extract_strided_slice %0 {offsets = [0, 0], sizes = [8, 1], strides = [1, 1]} : vector<8x2xf32> to vector<8x1xf32>
    %c0_1 = arith.constant 0 : index
    %c0_2 = arith.constant 0 : index
    %2 = vector.load %arg2[%c0_1, %c0_2] : memref<2x512xf32, #tpu.memory_space<vmem>>, vector<1x512xf32>
    %3 = vector.broadcast %1 : vector<8x1xf32> to vector<8x512xf32>
    %4 = vector.broadcast %2 : vector<1x512xf32> to vector<8x512xf32>
    %5 = arith.mulf %3, %4 : vector<8x512xf32>
    %6 = vector.extract_strided_slice %0 {offsets = [0, 1], sizes = [8, 1], strides = [1, 1]} : vector<8x2xf32> to vector<8x1xf32>
    %c1 = arith.constant 1 : index
    %c0_3 = arith.constant 0 : index
    %7 = vector.load %arg2[%c1, %c0_3] : memref<2x512xf32, #tpu.memory_space<vmem>>, vector<1x512xf32>
    %8 = vector.broadcast %6 : vector<8x1xf32> to vector<8x512xf32>
    %9 = vector.broadcast %7 : vector<1x512xf32> to vector<8x512xf32>
    %10 = arith.mulf %8, %9 : vector<8x512xf32>
    %11 = arith.addf %5, %10 : vector<8x512xf32>
    %c0_4 = arith.constant 0 : index
    %c0_5 = arith.constant 0 : index
    %12 = vector.load %arg3[%c0_4, %c0_5] : memref<1x512xf32, #tpu.memory_space<vmem>>, vector<1x512xf32>
    %13 = vector.broadcast %12 : vector<1x512xf32> to vector<8x512xf32>
    %14 = arith.addf %11, %13 : vector<8x512xf32>
    %cst = arith.constant 0.000000e+00 : f32
    %15 = vector.broadcast %cst : f32 to vector<8x512xf32>
    %16 = arith.maximumf %14, %15 : vector<8x512xf32>
    %17 = arith.truncf %16 : vector<8x512xf32> to vector<8x512xbf16>
    %c0_6 = arith.constant 0 : index
    %c0_7 = arith.constant 0 : index
    %18 = vector.load %arg4[%c0_6, %c0_7] : memref<512x784xbf16, #tpu.memory_space<vmem>>, vector<512x784xbf16>
    %cst_8 = arith.constant dense<0.000000e+00> : vector<8x784xf32>
    %19 = tpu.matmul %17, %18, %cst_8 {dimension_numbers = #tpu.dot_dimension_numbers<[1], [0], [0], [1], [0, 0, 1, 1], [], []>} : vector<8x512xbf16>, vector<512x784xbf16>, vector<8x784xf32> -> vector<8x784xf32>
    %c0_9 = arith.constant 0 : index
    %c0_10 = arith.constant 0 : index
    %20 = vector.load %arg5[%c0_9, %c0_10] : memref<1x784xf32, #tpu.memory_space<vmem>>, vector<1x784xf32>
    %21 = vector.broadcast %20 : vector<1x784xf32> to vector<8x784xf32>
    %22 = arith.addf %19, %21 : vector<8x784xf32>
    %cst_11 = arith.constant 5.000000e-01 : f32
    %23 = vector.broadcast %cst_11 : f32 to vector<8x784xf32>
    %24 = arith.mulf %23, %22 : vector<8x784xf32>
    %25 = math.tanh %24 : vector<8x784xf32>
    %cst_12 = arith.constant 1.000000e+00 : f32
    %26 = vector.broadcast %cst_12 : f32 to vector<8x784xf32>
    %27 = arith.addf %25, %26 : vector<8x784xf32>
    %cst_13 = arith.constant 5.000000e-01 : f32
    %28 = vector.broadcast %cst_13 : f32 to vector<8x784xf32>
    %29 = arith.mulf %28, %27 : vector<8x784xf32>
    %c0_14 = arith.constant 0 : index
    %c0_15 = arith.constant 0 : index
    %30 = vector.load %arg6[%c0_14, %c0_15] : memref<8x784xf32, #tpu.memory_space<vmem>>, vector<8x784xf32>
    tpu.vector_store %arg6[%c0_14, %c0_15], %29 {strides = array<i32>} : memref<8x784xf32, #tpu.memory_space<vmem>>, vector<8x784xf32>,
    return
  }
  func.func @transform_0(%arg0: i32) -> (i32, i32) {
    %c0_i32 = arith.constant 0 : i32
    %c0_i32_0 = arith.constant 0 : i32
    return %arg0, %c0_i32 : i32, i32
  }
  func.func @transform_1(%arg0: i32) -> (i32, i32) {
    %c0_i32 = arith.constant 0 : i32
    %c0_i32_0 = arith.constant 0 : i32
    %c0_i32_1 = arith.constant 0 : i32
    return %c0_i32, %c0_i32_0 : i32, i32
  }
  func.func @transform_2(%arg0: i32) -> (i32, i32) {
    %c0_i32 = arith.constant 0 : i32
    %c0_i32_0 = arith.constant 0 : i32
    %c0_i32_1 = arith.constant 0 : i32
    return %c0_i32, %c0_i32_0 : i32, i32
  }
  func.func @transform_3(%arg0: i32) -> (i32, i32) {
    %c0_i32 = arith.constant 0 : i32
    %c0_i32_0 = arith.constant 0 : i32
    %c0_i32_1 = arith.constant 0 : i32
    return %c0_i32, %c0_i32_0 : i32, i32
  }
  func.func @transform_4(%arg0: i32) -> (i32, i32) {
    %c0_i32 = arith.constant 0 : i32
    %c0_i32_0 = arith.constant 0 : i32
    %c0_i32_1 = arith.constant 0 : i32
    return %c0_i32, %c0_i32_0 : i32, i32
  }
  func.func @transform_5(%arg0: i32) -> (i32, i32) {
    %c0_i32 = arith.constant 0 : i32
    %c0_i32_0 = arith.constant 0 : i32
    return %arg0, %c0_i32 : i32, i32
  }
}

</mosaic_0001>

<llo_original>
// kernel: tpu_custom_call.1
$region0: #{tpu_custom_call.1}
  #allocation0 [shape = 'u32[]', space=smem, size = 0x4, offset = 0x4, fixed_abs, tag = 'smem constant byte address 0x4 - core index']
  #allocation1 [shape = 'u32[144,128]{1,0:T(1,128)}', space=vmem, size = 0x12000, scoped, tag = 'internal scratch']
  %s0 = inlined_call_operand.vmem [shape: f32[8,2], index: 0, kind: input, shape index: {}]
  %s1 = inlined_call_operand.vmem [shape: f32[2,512], index: 1, kind: input, shape index: {}]
  %s2 = inlined_call_operand.vmem [shape: f32[1,512], index: 2, kind: input, shape index: {}]
  %s3 = inlined_call_operand.vmem [shape: bf16[512,784], index: 3, kind: input, shape index: {}]
  %s4 = inlined_call_operand.vmem [shape: f32[1,784], index: 4, kind: input, shape index: {}]
  %s5 = inlined_call_operand.hbm [shape: f32[8,784], index: 5, kind: output, shape index: {}]
  %s6 = sld [smem:[#allocation0]]
  $region30: #{tpu_custom_call.1} parent=0
    _
  %s8 = ssub.s32 1, %s6
  %s9 = scalar_select 0, %s8, %s6
  $region1: #{tpu_custom_call.1} parent=0
    #allocation2 [shape = 'u8[28672]{0}', space=vmem, size = 0x7000, scoped, tag = 'output window, operand 0, single buffered']
    #allocation3 [shape = 's32[1]{0}', space=sflag, size = 0x4, scoped, tag = 'scoped memory for tpu_custom_call.1']
    %10 = vsyncpa [#allocation3], 0
    // Predicated region
    $region2: #{tpu_custom_call.1} parent=1 // pred_check
      _
    $region3: #{tpu_custom_call.1} parent=1 // pred_check_branch
      %12 = sbr.rel (0) target = $region5
    $region4: #{tpu_custom_call.1} parent=1 // pred_region
      _
    $region5: #{tpu_custom_call.1} parent=1 // pred_fallthru
      _
    // Predicated region
    $region6: #{tpu_custom_call.1} parent=1 // pred_check
      _
    $region7: #{tpu_custom_call.1} parent=1 // pred_check_branch
      %14 = sbr.rel (0) target = $region9
    $region8: #{tpu_custom_call.1} parent=1 // pred_region
      _
    $region9: #{tpu_custom_call.1} parent=1 // pred_fallthru
      _
    // Predicated region
    $region10: #{tpu_custom_call.1} parent=1 // pred_check
      _
    $region11: #{tpu_custom_call.1} parent=1 // pred_check_branch
      %16 = sbr.rel (0) target = $region13
    $region12: #{tpu_custom_call.1} parent=1 // pred_region
      _
    $region13: #{tpu_custom_call.1} parent=1 // pred_fallthru
      _
    // Predicated region
    $region14: #{tpu_custom_call.1} parent=1 // pred_check
      _
    $region15: #{tpu_custom_call.1} parent=1 // pred_check_branch
      %18 = sbr.rel (0) target = $region17
    $region16: #{tpu_custom_call.1} parent=1 // pred_region
      _
    $region17: #{tpu_custom_call.1} parent=1 // pred_fallthru
      _
    // Predicated region
    $region18: #{tpu_custom_call.1} parent=1 // pred_check
      _
    $region19: #{tpu_custom_call.1} parent=1 // pred_check_branch
      %20 = sbr.rel (0) target = $region21
    $region20: #{tpu_custom_call.1} parent=1 // pred_region
      _
    $region21: #{tpu_custom_call.1} parent=1 // pred_fallthru
      _
    %v22 = vld [vmem:[%s0] sm:$0xff]
    %v23 = vld [vmem:[%s1] ss:$2 sm:$0xf]
    %25 = vset.pattern.permute.xlu0 0
    %26 = vperm.xlu0 %25, %v22
    %v27 = vpop.permute.xlu0 %26
    %v30 = vlaneseq
    %v31 = vshrl.u32 %v30, 7
    %v32 = vsub.s32 0, %v31
    %v33 = vrot.slane %v23, %v32
    %v34 = vlaneseq
    %v35 = vshrl.u32 %v34, 7
    %v36 = vsub.s32 1, %v35
    %v37 = vrot.slane %v23, %v36
    %v38 = vlaneseq
    %v39 = vshrl.u32 %v38, 7
    %v40 = vsub.s32 2, %v39
    %v41 = vrot.slane %v23, %v40
    %v42 = vlaneseq
    %v43 = vshrl.u32 %v42, 7
    %v44 = vsub.s32 3, %v43
    %v45 = vrot.slane %v23, %v44
    %v50 = vmul.f32 %v27, %v33
    %v51 = vmul.f32 %v27, %v37
    %v52 = vmul.f32 %v27, %v41
    %v53 = vmul.f32 %v27, %v45
    %s54 = scalar_lea.vmem %s1, 1
    %v55 = vld [vmem:[%s54] ss:$2 sm:$0xf]
    %56 = vset.pattern.permute.xlu0 1
    %57 = vperm.xlu0 %56, %v22
    %v58 = vpop.permute.xlu0 %57
    %v61 = vlaneseq
    %v62 = vshrl.u32 %v61, 7
    %v63 = vsub.s32 0, %v62
    %v64 = vrot.slane %v55, %v63
    %v65 = vlaneseq
    %v66 = vshrl.u32 %v65, 7
    %v67 = vsub.s32 1, %v66
    %v68 = vrot.slane %v55, %v67
    %v69 = vlaneseq
    %v70 = vshrl.u32 %v69, 7
    %v71 = vsub.s32 2, %v70
    %v72 = vrot.slane %v55, %v71
    %v73 = vlaneseq
    %v74 = vshrl.u32 %v73, 7
    %v75 = vsub.s32 3, %v74
    %v76 = vrot.slane %v55, %v75
    %v81 = vmul.f32 %v58, %v64
    %v82 = vmul.f32 %v58, %v68
    %v83 = vmul.f32 %v58, %v72
    %v84 = vmul.f32 %v58, %v76
    %v85 = vadd.f32 %v50, %v81
    %v86 = vadd.f32 %v51, %v82
    %v87 = vadd.f32 %v52, %v83
    %v88 = vadd.f32 %v53, %v84
    %v89 = vld [vmem:[%s2] sm:$0xf]
    %v91 = vlaneseq
    %v92 = vshrl.u32 %v91, 7
    %v93 = vsub.s32 0, %v92
    %v94 = vrot.slane %v89, %v93
    %v95 = vlaneseq
    %v96 = vshrl.u32 %v95, 7
    %v97 = vsub.s32 1, %v96
    %v98 = vrot.slane %v89, %v97
    %v99 = vlaneseq
    %v100 = vshrl.u32 %v99, 7
    %v101 = vsub.s32 2, %v100
    %v102 = vrot.slane %v89, %v101
    %v103 = vlaneseq
    %v104 = vshrl.u32 %v103, 7
    %v105 = vsub.s32 3, %v104
    %v106 = vrot.slane %v89, %v105
    %v111 = vadd.f32 %v85, %v94
    %v112 = vadd.f32 %v86, %v98
    %v113 = vadd.f32 %v87, %v102
    %v114 = vadd.f32 %v88, %v106
    %v115 = vmax.f32 %v111, 0.0
    %v116 = vmax.f32 %v112, 0.0
    %v117 = vmax.f32 %v113, 0.0
    %v118 = vmax.f32 %v114, 0.0
    %v119 = vpack.c.bf16 %v115, %v115
    %v120 = vpack.c.bf16 %v116, %v116
    %v121 = vpack.c.bf16 %v117, %v117
    %v122 = vpack.c.bf16 %v118, %v118
    %v123 = vld [vmem:[%s3] sm:$0xff]
    %v124 = vld [vmem:[%s3 + $0x8] sm:$0xff]
    %v125 = vld [vmem:[%s3 + $0x10] sm:$0xff]
    %v126 = vld [vmem:[%s3 + $0x18] sm:$0xf]
    %v127 = vld [vmem:[%s3 + $0x1c] sm:$0xff]
    %v128 = vld [vmem:[%s3 + $0x24] sm:$0xff]
    %v129 = vld [vmem:[%s3 + $0x2c] sm:$0xff]
    %v130 = vld [vmem:[%s3 + $0x34] sm:$0xf]
    %v131 = vld [vmem:[%s3 + $0x38] sm:$0xff]
    %v132 = vld [vmem:[%s3 + $0x40] sm:$0xff]
    %v133 = vld [vmem:[%s3 + $0x48] sm:$0xff]
    %v134 = vld [vmem:[%s3 + $0x50] sm:$0xf]
    %v135 = vld [vmem:[%s3 + $0x54] sm:$0xff]
    %v136 = vld [vmem:[%s3 + $0x5c] sm:$0xff]
    %v137 = vld [vmem:[%s3 + $0x64] sm:$0xff]
    %v138 = vld [vmem:[%s3 + $0x6c] sm:$0xf]
    %v139 = vld [vmem:[%s3 + $0x70] sm:$0xff]
    %v140 = vld [vmem:[%s3 + $0x78] sm:$0xff]
    %v141 = vld [vmem:[%s3 + $0x80] sm:$0xff]
    %v142 = vld [vmem:[%s3 + $0x88] sm:$0xf]
    %v143 = vld [vmem:[%s3 + $0x8c] sm:$0xff]
    %v144 = vld [vmem:[%s3 + $0x94] sm:$0xff]
    %v145 = vld [vmem:[%s3 + $0x9c] sm:$0xff]
    %v146 = vld [vmem:[%s3 + $0xa4] sm:$0xf]
    %v147 = vld [vmem:[%s3 + $0xa8] sm:$0xff]
    %v148 = vld [vmem:[%s3 + $0xb0] sm:$0xff]
    %v149 = vld [vmem:[%s3 + $0xb8] sm:$0xff]
    %v150 = vld [vmem:[%s3 + $0xc0] sm:$0xf]
    %v151 = vld [vmem:[%s3 + $0xc4] sm:$0xff]
    %v152 = vld [vmem:[%s3 + $0xcc] sm:$0xff]
    %v153 = vld [vmem:[%s3 + $0xd4] sm:$0xff]
    %v154 = vld [vmem:[%s3 + $0xdc] sm:$0xf]
    %v155 = vld [vmem:[%s3 + $0xe0] sm:$0xff]
    %v156 = vld [vmem:[%s3 + $0xe8] sm:$0xff]
    %v157 = vld [vmem:[%s3 + $0xf0] sm:$0xff]
    %v158 = vld [vmem:[%s3 + $0xf8] sm:$0xf]
    %v159 = vld [vmem:[%s3 + $0xfc] sm:$0xff]
    %v160 = vld [vmem:[%s3 + $0x104] sm:$0xff]
    %v161 = vld [vmem:[%s3 + $0x10c] sm:$0xff]
    %v162 = vld [vmem:[%s3 + $0x114] sm:$0xf]
    %v163 = vld [vmem:[%s3 + $0x118] sm:$0xff]
    %v164 = vld [vmem:[%s3 + $0x120] sm:$0xff]
    %v165 = vld [vmem:[%s3 + $0x128] sm:$0xff]
    %v166 = vld [vmem:[%s3 + $0x130] sm:$0xf]
    %v167 = vld [vmem:[%s3 + $0x134] sm:$0xff]
    %v168 = vld [vmem:[%s3 + $0x13c] sm:$0xff]
    %v169 = vld [vmem:[%s3 + $0x144] sm:$0xff]
    %v170 = vld [vmem:[%s3 + $0x14c] sm:$0xf]
    %v171 = vld [vmem:[%s3 + $0x150] sm:$0xff]
    %v172 = vld [vmem:[%s3 + $0x158] sm:$0xff]
    %v173 = vld [vmem:[%s3 + $0x160] sm:$0xff]
    %v174 = vld [vmem:[%s3 + $0x168] sm:$0xf]
    %v175 = vld [vmem:[%s3 + $0x16c] sm:$0xff]
    %v176 = vld [vmem:[%s3 + $0x174] sm:$0xff]
    %v177 = vld [vmem:[%s3 + $0x17c] sm:$0xff]
    %v178 = vld [vmem:[%s3 + $0x184] sm:$0xf]
    %v179 = vld [vmem:[%s3 + $0x188] sm:$0xff]
    %v180 = vld [vmem:[%s3 + $0x190] sm:$0xff]
    %v181 = vld [vmem:[%s3 + $0x198] sm:$0xff]
    %v182 = vld [vmem:[%s3 + $0x1a0] sm:$0xf]
    %v183 = vld [vmem:[%s3 + $0x1a4] sm:$0xff]
    %v184 = vld [vmem:[%s3 + $0x1ac] sm:$0xff]
    %v185 = vld [vmem:[%s3 + $0x1b4] sm:$0xff]
    %v186 = vld [vmem:[%s3 + $0x1bc] sm:$0xf]
    %v187 = vld [vmem:[%s3 + $0x1c0] sm:$0xff]
    %v188 = vld [vmem:[%s3 + $0x1c8] sm:$0xff]
    %v189 = vld [vmem:[%s3 + $0x1d0] sm:$0xff]
    %v190 = vld [vmem:[%s3 + $0x1d8] sm:$0xf]
    %v191 = vld [vmem:[%s3 + $0x1dc] sm:$0xff]
    %v192 = vld [vmem:[%s3 + $0x1e4] sm:$0xff]
    %v193 = vld [vmem:[%s3 + $0x1ec] sm:$0xff]
    %v194 = vld [vmem:[%s3 + $0x1f4] sm:$0xf]
    %v195 = vld [vmem:[%s3 + $0x1f8] sm:$0xff]
    %v196 = vld [vmem:[%s3 + $0x200] sm:$0xff]
    %v197 = vld [vmem:[%s3 + $0x208] sm:$0xff]
    %v198 = vld [vmem:[%s3 + $0x210] sm:$0xf]
    %v199 = vld [vmem:[%s3 + $0x214] sm:$0xff]
    %v200 = vld [vmem:[%s3 + $0x21c] sm:$0xff]
    %v201 = vld [vmem:[%s3 + $0x224] sm:$0xff]
    %v202 = vld [vmem:[%s3 + $0x22c] sm:$0xf]
    %v203 = vld [vmem:[%s3 + $0x230] sm:$0xff]
    %v204 = vld [vmem:[%s3 + $0x238] sm:$0xff]
    %v205 = vld [vmem:[%s3 + $0x240] sm:$0xff]
    %v206 = vld [vmem:[%s3 + $0x248] sm:$0xf]
    %v207 = vld [vmem:[%s3 + $0x24c] sm:$0xff]
    %v208 = vld [vmem:[%s3 + $0x254] sm:$0xff]
    %v209 = vld [vmem:[%s3 + $0x25c] sm:$0xff]
    %v210 = vld [vmem:[%s3 + $0x264] sm:$0xf]
    %v211 = vld [vmem:[%s3 + $0x268] sm:$0xff]
    %v212 = vld [vmem:[%s3 + $0x270] sm:$0xff]
    %v213 = vld [vmem:[%s3 + $0x278] sm:$0xff]
    %v214 = vld [vmem:[%s3 + $0x280] sm:$0xf]
    %v215 = vld [vmem:[%s3 + $0x284] sm:$0xff]
    %v216 = vld [vmem:[%s3 + $0x28c] sm:$0xff]
    %v217 = vld [vmem:[%s3 + $0x294] sm:$0xff]
    %v218 = vld [vmem:[%s3 + $0x29c] sm:$0xf]
    %v219 = vld [vmem:[%s3 + $0x2a0] sm:$0xff]
    %v220 = vld [vmem:[%s3 + $0x2a8] sm:$0xff]
    %v221 = vld [vmem:[%s3 + $0x2b0] sm:$0xff]
    %v222 = vld [vmem:[%s3 + $0x2b8] sm:$0xf]
    %v223 = vld [vmem:[%s3 + $0x2bc] sm:$0xff]
    %v224 = vld [vmem:[%s3 + $0x2c4] sm:$0xff]
    %v225 = vld [vmem:[%s3 + $0x2cc] sm:$0xff]
    %v226 = vld [vmem:[%s3 + $0x2d4] sm:$0xf]
    %v227 = vld [vmem:[%s3 + $0x2d8] sm:$0xff]
    %v228 = vld [vmem:[%s3 + $0x2e0] sm:$0xff]
    %v229 = vld [vmem:[%s3 + $0x2e8] sm:$0xff]
    %v230 = vld [vmem:[%s3 + $0x2f0] sm:$0xf]
    %v231 = vld [vmem:[%s3 + $0x2f4] sm:$0xff]
    %v232 = vld [vmem:[%s3 + $0x2fc] sm:$0xff]
    %v233 = vld [vmem:[%s3 + $0x304] sm:$0xff]
    %v234 = vld [vmem:[%s3 + $0x30c] sm:$0xf]
    %v235 = vld [vmem:[%s3 + $0x310] sm:$0xff]
    %v236 = vld [vmem:[%s3 + $0x318] sm:$0xff]
    %v237 = vld [vmem:[%s3 + $0x320] sm:$0xff]
    %v238 = vld [vmem:[%s3 + $0x328] sm:$0xf]
    %v239 = vld [vmem:[%s3 + $0x32c] sm:$0xff]
    %v240 = vld [vmem:[%s3 + $0x334] sm:$0xff]
    %v241 = vld [vmem:[%s3 + $0x33c] sm:$0xff]
    %v242 = vld [vmem:[%s3 + $0x344] sm:$0xf]
    %v243 = vld [vmem:[%s3 + $0x348] sm:$0xff]
    %v244 = vld [vmem:[%s3 + $0x350] sm:$0xff]
    %v245 = vld [vmem:[%s3 + $0x358] sm:$0xff]
    %v246 = vld [vmem:[%s3 + $0x360] sm:$0xf]
    %v247 = vld [vmem:[%s3 + $0x364] sm:$0xff]
    %v248 = vld [vmem:[%s3 + $0x36c] sm:$0xff]
    %v249 = vld [vmem:[%s3 + $0x374] sm:$0xff]
    %v250 = vld [vmem:[%s3 + $0x37c] sm:$0xf]
    %v251 = vld [vmem:[%s3 + $0x380] sm:$0xff]
    %v252 = vld [vmem:[%s3 + $0x388] sm:$0xff]
    %v253 = vld [vmem:[%s3 + $0x390] sm:$0xff]
    %v254 = vld [vmem:[%s3 + $0x398] sm:$0xf]
    %v255 = vld [vmem:[%s3 + $0x39c] sm:$0xff]
    %v256 = vld [vmem:[%s3 + $0x3a4] sm:$0xff]
    %v257 = vld [vmem:[%s3 + $0x3ac] sm:$0xff]
    %v258 = vld [vmem:[%s3 + $0x3b4] sm:$0xf]
    %v259 = vld [vmem:[%s3 + $0x3b8] sm:$0xff]
    %v260 = vld [vmem:[%s3 + $0x3c0] sm:$0xff]
    %v261 = vld [vmem:[%s3 + $0x3c8] sm:$0xff]
    %v262 = vld [vmem:[%s3 + $0x3d0] sm:$0xf]
    %v263 = vld [vmem:[%s3 + $0x3d4] sm:$0xff]
    %v264 = vld [vmem:[%s3 + $0x3dc] sm:$0xff]
    %v265 = vld [vmem:[%s3 + $0x3e4] sm:$0xff]
    %v266 = vld [vmem:[%s3 + $0x3ec] sm:$0xf]
    %v267 = vld [vmem:[%s3 + $0x3f0] sm:$0xff]
    %v268 = vld [vmem:[%s3 + $0x3f8] sm:$0xff]
    %v269 = vld [vmem:[%s3 + $0x400] sm:$0xff]
    %v270 = vld [vmem:[%s3 + $0x408] sm:$0xf]
    %v271 = vld [vmem:[%s3 + $0x40c] sm:$0xff]
    %v272 = vld [vmem:[%s3 + $0x414] sm:$0xff]
    %v273 = vld [vmem:[%s3 + $0x41c] sm:$0xff]
    %v274 = vld [vmem:[%s3 + $0x424] sm:$0xf]
    %v275 = vld [vmem:[%s3 + $0x428] sm:$0xff]
    %v276 = vld [vmem:[%s3 + $0x430] sm:$0xff]
    %v277 = vld [vmem:[%s3 + $0x438] sm:$0xff]
    %v278 = vld [vmem:[%s3 + $0x440] sm:$0xf]
    %v279 = vld [vmem:[%s3 + $0x444] sm:$0xff]
    %v280 = vld [vmem:[%s3 + $0x44c] sm:$0xff]
    %v281 = vld [vmem:[%s3 + $0x454] sm:$0xff]
    %v282 = vld [vmem:[%s3 + $0x45c] sm:$0xf]
    %v283 = vld [vmem:[%s3 + $0x460] sm:$0xff]
    %v284 = vld [vmem:[%s3 + $0x468] sm:$0xff]
    %v285 = vld [vmem:[%s3 + $0x470] sm:$0xff]
    %v286 = vld [vmem:[%s3 + $0x478] sm:$0xf]
    %v287 = vld [vmem:[%s3 + $0x47c] sm:$0xff]
    %v288 = vld [vmem:[%s3 + $0x484] sm:$0xff]
    %v289 = vld [vmem:[%s3 + $0x48c] sm:$0xff]
    %v290 = vld [vmem:[%s3 + $0x494] sm:$0xf]
    %v291 = vld [vmem:[%s3 + $0x498] sm:$0xff]
    %v292 = vld [vmem:[%s3 + $0x4a0] sm:$0xff]
    %v293 = vld [vmem:[%s3 + $0x4a8] sm:$0xff]
    %v294 = vld [vmem:[%s3 + $0x4b0] sm:$0xf]
    %v295 = vld [vmem:[%s3 + $0x4b4] sm:$0xff]
    %v296 = vld [vmem:[%s3 + $0x4bc] sm:$0xff]
    %v297 = vld [vmem:[%s3 + $0x4c4] sm:$0xff]
    %v298 = vld [vmem:[%s3 + $0x4cc] sm:$0xf]
    %v299 = vld [vmem:[%s3 + $0x4d0] sm:$0xff]
    %v300 = vld [vmem:[%s3 + $0x4d8] sm:$0xff]
    %v301 = vld [vmem:[%s3 + $0x4e0] sm:$0xff]
    %v302 = vld [vmem:[%s3 + $0x4e8] sm:$0xf]
    %v303 = vld [vmem:[%s3 + $0x4ec] sm:$0xff]
    %v304 = vld [vmem:[%s3 + $0x4f4] sm:$0xff]
    %v305 = vld [vmem:[%s3 + $0x4fc] sm:$0xff]
    %v306 = vld [vmem:[%s3 + $0x504] sm:$0xf]
    %v307 = vld [vmem:[%s3 + $0x508] sm:$0xff]
    %v308 = vld [vmem:[%s3 + $0x510] sm:$0xff]
    %v309 = vld [vmem:[%s3 + $0x518] sm:$0xff]
    %v310 = vld [vmem:[%s3 + $0x520] sm:$0xf]
    %v311 = vld [vmem:[%s3 + $0x524] sm:$0xff]
    %v312 = vld [vmem:[%s3 + $0x52c] sm:$0xff]
    %v313 = vld [vmem:[%s3 + $0x534] sm:$0xff]
    %v314 = vld [vmem:[%s3 + $0x53c] sm:$0xf]
    %v315 = vld [vmem:[%s3 + $0x540] sm:$0xff]
    %v316 = vld [vmem:[%s3 + $0x548] sm:$0xff]
    %v317 = vld [vmem:[%s3 + $0x550] sm:$0xff]
    %v318 = vld [vmem:[%s3 + $0x558] sm:$0xf]
    %v319 = vld [vmem:[%s3 + $0x55c] sm:$0xff]
    %v320 = vld [vmem:[%s3 + $0x564] sm:$0xff]
    %v321 = vld [vmem:[%s3 + $0x56c] sm:$0xff]
    %v322 = vld [vmem:[%s3 + $0x574] sm:$0xf]
    %v323 = vld [vmem:[%s3 + $0x578] sm:$0xff]
    %v324 = vld [vmem:[%s3 + $0x580] sm:$0xff]
    %v325 = vld [vmem:[%s3 + $0x588] sm:$0xff]
    %v326 = vld [vmem:[%s3 + $0x590] sm:$0xf]
    %v327 = vld [vmem:[%s3 + $0x594] sm:$0xff]
    %v328 = vld [vmem:[%s3 + $0x59c] sm:$0xff]
    %v329 = vld [vmem:[%s3 + $0x5a4] sm:$0xff]
    %v330 = vld [vmem:[%s3 + $0x5ac] sm:$0xf]
    %v331 = vld [vmem:[%s3 + $0x5b0] sm:$0xff]
    %v332 = vld [vmem:[%s3 + $0x5b8] sm:$0xff]
    %v333 = vld [vmem:[%s3 + $0x5c0] sm:$0xff]
    %v334 = vld [vmem:[%s3 + $0x5c8] sm:$0xf]
    %v335 = vld [vmem:[%s3 + $0x5cc] sm:$0xff]
    %v336 = vld [vmem:[%s3 + $0x5d4] sm:$0xff]
    %v337 = vld [vmem:[%s3 + $0x5dc] sm:$0xff]
    %v338 = vld [vmem:[%s3 + $0x5e4] sm:$0xf]
    %v339 = vld [vmem:[%s3 + $0x5e8] sm:$0xff]
    %v340 = vld [vmem:[%s3 + $0x5f0] sm:$0xff]
    %v341 = vld [vmem:[%s3 + $0x5f8] sm:$0xff]
    %v342 = vld [vmem:[%s3 + $0x600] sm:$0xf]
    %v343 = vld [vmem:[%s3 + $0x604] sm:$0xff]
    %v344 = vld [vmem:[%s3 + $0x60c] sm:$0xff]
    %v345 = vld [vmem:[%s3 + $0x614] sm:$0xff]
    %v346 = vld [vmem:[%s3 + $0x61c] sm:$0xf]
    %v347 = vld [vmem:[%s3 + $0x620] sm:$0xff]
    %v348 = vld [vmem:[%s3 + $0x628] sm:$0xff]
    %v349 = vld [vmem:[%s3 + $0x630] sm:$0xff]
    %v350 = vld [vmem:[%s3 + $0x638] sm:$0xf]
    %v351 = vld [vmem:[%s3 + $0x63c] sm:$0xff]
    %v352 = vld [vmem:[%s3 + $0x644] sm:$0xff]
    %v353 = vld [vmem:[%s3 + $0x64c] sm:$0xff]
    %v354 = vld [vmem:[%s3 + $0x654] sm:$0xf]
    %v355 = vld [vmem:[%s3 + $0x658] sm:$0xff]
    %v356 = vld [vmem:[%s3 + $0x660] sm:$0xff]
    %v357 = vld [vmem:[%s3 + $0x668] sm:$0xff]
    %v358 = vld [vmem:[%s3 + $0x670] sm:$0xf]
    %v359 = vld [vmem:[%s3 + $0x674] sm:$0xff]
    %v360 = vld [vmem:[%s3 + $0x67c] sm:$0xff]
    %v361 = vld [vmem:[%s3 + $0x684] sm:$0xff]
    %v362 = vld [vmem:[%s3 + $0x68c] sm:$0xf]
    %v363 = vld [vmem:[%s3 + $0x690] sm:$0xff]
    %v364 = vld [vmem:[%s3 + $0x698] sm:$0xff]
    %v365 = vld [vmem:[%s3 + $0x6a0] sm:$0xff]
    %v366 = vld [vmem:[%s3 + $0x6a8] sm:$0xf]
    %v367 = vld [vmem:[%s3 + $0x6ac] sm:$0xff]
    %v368 = vld [vmem:[%s3 + $0x6b4] sm:$0xff]
    %v369 = vld [vmem:[%s3 + $0x6bc] sm:$0xff]
    %v370 = vld [vmem:[%s3 + $0x6c4] sm:$0xf]
    %v371 = vld [vmem:[%s3 + $0x6c8] sm:$0xff]
    %v372 = vld [vmem:[%s3 + $0x6d0] sm:$0xff]
    %v373 = vld [vmem:[%s3 + $0x6d8] sm:$0xff]
    %v374 = vld [vmem:[%s3 + $0x6e0] sm:$0xf]
    %v375 = vld [vmem:[%s3 + $0x6e4] sm:$0xff]
    %v376 = vld [vmem:[%s3 + $0x6ec] sm:$0xff]
    %v377 = vld [vmem:[%s3 + $0x6f4] sm:$0xff]
    %v378 = vld [vmem:[%s3 + $0x6fc] sm:$0xf]
    %v379 = vld [vmem:[%s4] sm:$0x7f]
    %v381 = vlaneseq
    %v382 = vshrl.u32 %v381, 7
    %v383 = vsub.s32 0, %v382
    %v384 = vrot.slane %v379, %v383
    %v385 = vlaneseq
    %v386 = vshrl.u32 %v385, 7
    %v387 = vsub.s32 1, %v386
    %v388 = vrot.slane %v379, %v387
    %v389 = vlaneseq
    %v390 = vshrl.u32 %v389, 7
    %v391 = vsub.s32 2, %v390
    %v392 = vrot.slane %v379, %v391
    %v393 = vlaneseq
    %v394 = vshrl.u32 %v393, 7
    %v395 = vsub.s32 3, %v394
    %v396 = vrot.slane %v379, %v395
    %v397 = vlaneseq
    %v398 = vshrl.u32 %v397, 7
    %v399 = vsub.s32 4, %v398
    %v400 = vrot.slane %v379, %v399
    %v401 = vlaneseq
    %v402 = vshrl.u32 %v401, 7
    %v403 = vsub.s32 5, %v402
    %v404 = vrot.slane %v379, %v403
    %v405 = vlaneseq
    %v406 = vshrl.u32 %v405, 7
    %v407 = vsub.s32 6, %v406
    %v408 = vrot.slane %v379, %v407
    %v672 = vunpack.c.l.b16 %v123
    %v673 = vunpack.c.h.b16 %v123
    %v674 = vunpack.c.l.b16 %v124
    %v675 = vunpack.c.h.b16 %v124
    %v676 = vunpack.c.l.b16 %v125
    %v677 = vunpack.c.h.b16 %v125
    %v678 = vunpack.c.l.b16 %v126
    %v679 = vunpack.c.l.b16 %v127
    %v680 = vunpack.c.h.b16 %v127
    %v681 = vunpack.c.l.b16 %v128
    %v682 = vunpack.c.h.b16 %v128
    %v683 = vunpack.c.l.b16 %v129
    %v684 = vunpack.c.h.b16 %v129
    %v685 = vunpack.c.l.b16 %v130
    %v686 = vunpack.c.l.b16 %v131
    %v687 = vunpack.c.h.b16 %v131
    %v688 = vunpack.c.l.b16 %v132
    %v689 = vunpack.c.h.b16 %v132
    %v690 = vunpack.c.l.b16 %v133
    %v691 = vunpack.c.h.b16 %v133
    %v692 = vunpack.c.l.b16 %v134
    %v693 = vunpack.c.l.b16 %v135
    %v694 = vunpack.c.h.b16 %v135
    %v695 = vunpack.c.l.b16 %v136
    %v696 = vunpack.c.h.b16 %v136
    %v697 = vunpack.c.l.b16 %v137
    %v698 = vunpack.c.h.b16 %v137
    %v699 = vunpack.c.l.b16 %v138
    %v700 = vunpack.c.l.b16 %v139
    %v701 = vunpack.c.h.b16 %v139
    %v702 = vunpack.c.l.b16 %v140
    %v703 = vunpack.c.h.b16 %v140
    %v704 = vunpack.c.l.b16 %v141
    %v705 = vunpack.c.h.b16 %v141
    %v706 = vunpack.c.l.b16 %v142
    %v707 = vunpack.c.l.b16 %v143
    %v708 = vunpack.c.h.b16 %v143
    %v709 = vunpack.c.l.b16 %v144
    %v710 = vunpack.c.h.b16 %v144
    %v711 = vunpack.c.l.b16 %v145
    %v712 = vunpack.c.h.b16 %v145
    %v713 = vunpack.c.l.b16 %v146
    %v714 = vunpack.c.l.b16 %v147
    %v715 = vunpack.c.h.b16 %v147
    %v716 = vunpack.c.l.b16 %v148
    %v717 = vunpack.c.h.b16 %v148
    %v718 = vunpack.c.l.b16 %v149
    %v719 = vunpack.c.h.b16 %v149
    %v720 = vunpack.c.l.b16 %v150
    %v721 = vunpack.c.l.b16 %v151
    %v722 = vunpack.c.h.b16 %v151
    %v723 = vunpack.c.l.b16 %v152
    %v724 = vunpack.c.h.b16 %v152
    %v725 = vunpack.c.l.b16 %v153
    %v726 = vunpack.c.h.b16 %v153
    %v727 = vunpack.c.l.b16 %v154
    %v728 = vunpack.c.l.b16 %v155
    %v729 = vunpack.c.h.b16 %v155
    %v730 = vunpack.c.l.b16 %v156
    %v731 = vunpack.c.h.b16 %v156
    %v732 = vunpack.c.l.b16 %v157
    %v733 = vunpack.c.h.b16 %v157
    %v734 = vunpack.c.l.b16 %v158
    %v735 = vunpack.c.l.b16 %v159
    %v736 = vunpack.c.h.b16 %v159
    %v737 = vunpack.c.l.b16 %v160
    %v738 = vunpack.c.h.b16 %v160
    %v739 = vunpack.c.l.b16 %v161
    %v740 = vunpack.c.h.b16 %v161
    %v741 = vunpack.c.l.b16 %v162
    %v742 = vunpack.c.l.b16 %v163
    %v743 = vunpack.c.h.b16 %v163
    %v744 = vunpack.c.l.b16 %v164
    %v745 = vunpack.c.h.b16 %v164
    %v746 = vunpack.c.l.b16 %v165
    %v747 = vunpack.c.h.b16 %v165
    %v748 = vunpack.c.l.b16 %v166
    %v749 = vunpack.c.l.b16 %v167
    %v750 = vunpack.c.h.b16 %v167
    %v751 = vunpack.c.l.b16 %v168
    %v752 = vunpack.c.h.b16 %v168
    %v753 = vunpack.c.l.b16 %v169
    %v754 = vunpack.c.h.b16 %v169
    %v755 = vunpack.c.l.b16 %v170
    %v756 = vunpack.c.l.b16 %v171
    %v757 = vunpack.c.h.b16 %v171
    %v758 = vunpack.c.l.b16 %v172
    %v759 = vunpack.c.h.b16 %v172
    %v760 = vunpack.c.l.b16 %v173
    %v761 = vunpack.c.h.b16 %v173
    %v762 = vunpack.c.l.b16 %v174
    %v763 = vunpack.c.l.b16 %v175
    %v764 = vunpack.c.h.b16 %v175
    %v765 = vunpack.c.l.b16 %v176
    %v766 = vunpack.c.h.b16 %v176
    %v767 = vunpack.c.l.b16 %v177
    %v768 = vunpack.c.h.b16 %v177
    %v769 = vunpack.c.l.b16 %v178
    %v770 = vunpack.c.l.b16 %v179
    %v771 = vunpack.c.h.b16 %v179
    %v772 = vunpack.c.l.b16 %v180
    %v773 = vunpack.c.h.b16 %v180
    %v774 = vunpack.c.l.b16 %v181
    %v775 = vunpack.c.h.b16 %v181
    %v776 = vunpack.c.l.b16 %v182
    %v777 = vunpack.c.l.b16 %v183
    %v778 = vunpack.c.h.b16 %v183
    %v779 = vunpack.c.l.b16 %v184
    %v780 = vunpack.c.h.b16 %v184
    %v781 = vunpack.c.l.b16 %v185
    %v782 = vunpack.c.h.b16 %v185
    %v783 = vunpack.c.l.b16 %v186
    %v784 = vunpack.c.l.b16 %v187
    %v785 = vunpack.c.h.b16 %v187
    %v786 = vunpack.c.l.b16 %v188
    %v787 = vunpack.c.h.b16 %v188
    %v788 = vunpack.c.l.b16 %v189
    %v789 = vunpack.c.h.b16 %v189
    %v790 = vunpack.c.l.b16 %v190
    %v791 = vunpack.c.l.b16 %v191
    %v792 = vunpack.c.h.b16 %v191
    %v793 = vunpack.c.l.b16 %v192
    %v794 = vunpack.c.h.b16 %v192
    %v795 = vunpack.c.l.b16 %v193
    %v796 = vunpack.c.h.b16 %v193
    %v797 = vunpack.c.l.b16 %v194
    %v798 = vunpack.c.l.b16 %v195
    %v799 = vunpack.c.h.b16 %v195
    %v800 = vunpack.c.l.b16 %v196
    %v801 = vunpack.c.h.b16 %v196
    %v802 = vunpack.c.l.b16 %v197
    %v803 = vunpack.c.h.b16 %v197
    %v804 = vunpack.c.l.b16 %v198
    %v805 = vunpack.c.l.b16 %v199
    %v806 = vunpack.c.h.b16 %v199
    %v807 = vunpack.c.l.b16 %v200
    %v808 = vunpack.c.h.b16 %v200
    %v809 = vunpack.c.l.b16 %v201
    %v810 = vunpack.c.h.b16 %v201
    %v811 = vunpack.c.l.b16 %v202
    %v812 = vunpack.c.l.b16 %v203
    %v813 = vunpack.c.h.b16 %v203
    %v814 = vunpack.c.l.b16 %v204
    %v815 = vunpack.c.h.b16 %v204
    %v816 = vunpack.c.l.b16 %v205
    %v817 = vunpack.c.h.b16 %v205
    %v818 = vunpack.c.l.b16 %v206
    %v819 = vunpack.c.l.b16 %v207
    %v820 = vunpack.c.h.b16 %v207
    %v821 = vunpack.c.l.b16 %v208
    %v822 = vunpack.c.h.b16 %v208
    %v823 = vunpack.c.l.b16 %v209
    %v824 = vunpack.c.h.b16 %v209
    %v825 = vunpack.c.l.b16 %v210
    %v826 = vunpack.c.l.b16 %v211
    %v827 = vunpack.c.h.b16 %v211
    %v828 = vunpack.c.l.b16 %v212
    %v829 = vunpack.c.h.b16 %v212
    %v830 = vunpack.c.l.b16 %v213
    %v831 = vunpack.c.h.b16 %v213
    %v832 = vunpack.c.l.b16 %v214
    %v833 = vunpack.c.l.b16 %v215
    %v834 = vunpack.c.h.b16 %v215
    %v835 = vunpack.c.l.b16 %v216
    %v836 = vunpack.c.h.b16 %v216
    %v837 = vunpack.c.l.b16 %v217
    %v838 = vunpack.c.h.b16 %v217
    %v839 = vunpack.c.l.b16 %v218
    %v840 = vunpack.c.l.b16 %v219
    %v841 = vunpack.c.h.b16 %v219
    %v842 = vunpack.c.l.b16 %v220
    %v843 = vunpack.c.h.b16 %v220
    %v844 = vunpack.c.l.b16 %v221
    %v845 = vunpack.c.h.b16 %v221
    %v846 = vunpack.c.l.b16 %v222
    %v847 = vunpack.c.l.b16 %v223
    %v848 = vunpack.c.h.b16 %v223
    %v849 = vunpack.c.l.b16 %v224
    %v850 = vunpack.c.h.b16 %v224
    %v851 = vunpack.c.l.b16 %v225
    %v852 = vunpack.c.h.b16 %v225
    %v853 = vunpack.c.l.b16 %v226
    %v854 = vunpack.c.l.b16 %v227
    %v855 = vunpack.c.h.b16 %v227
    %v856 = vunpack.c.l.b16 %v228
    %v857 = vunpack.c.h.b16 %v228
    %v858 = vunpack.c.l.b16 %v229
    %v859 = vunpack.c.h.b16 %v229
    %v860 = vunpack.c.l.b16 %v230
    %v861 = vunpack.c.l.b16 %v231
    %v862 = vunpack.c.h.b16 %v231
    %v863 = vunpack.c.l.b16 %v232
    %v864 = vunpack.c.h.b16 %v232
    %v865 = vunpack.c.l.b16 %v233
    %v866 = vunpack.c.h.b16 %v233
    %v867 = vunpack.c.l.b16 %v234
    %v868 = vunpack.c.l.b16 %v235
    %v869 = vunpack.c.h.b16 %v235
    %v870 = vunpack.c.l.b16 %v236
    %v871 = vunpack.c.h.b16 %v236
    %v872 = vunpack.c.l.b16 %v237
    %v873 = vunpack.c.h.b16 %v237
    %v874 = vunpack.c.l.b16 %v238
    %v875 = vunpack.c.l.b16 %v239
    %v876 = vunpack.c.h.b16 %v239
    %v877 = vunpack.c.l.b16 %v240
    %v878 = vunpack.c.h.b16 %v240
    %v879 = vunpack.c.l.b16 %v241
    %v880 = vunpack.c.h.b16 %v241
    %v881 = vunpack.c.l.b16 %v242
    %v882 = vunpack.c.l.b16 %v243
    %v883 = vunpack.c.h.b16 %v243
    %v884 = vunpack.c.l.b16 %v244
    %v885 = vunpack.c.h.b16 %v244
    %v886 = vunpack.c.l.b16 %v245
    %v887 = vunpack.c.h.b16 %v245
    %v888 = vunpack.c.l.b16 %v246
    %v889 = vunpack.c.l.b16 %v247
    %v890 = vunpack.c.h.b16 %v247
    %v891 = vunpack.c.l.b16 %v248
    %v892 = vunpack.c.h.b16 %v248
    %v893 = vunpack.c.l.b16 %v249
    %v894 = vunpack.c.h.b16 %v249
    %v895 = vunpack.c.l.b16 %v250
    %v896 = vunpack.c.l.b16 %v251
    %v897 = vunpack.c.h.b16 %v251
    %v898 = vunpack.c.l.b16 %v252
    %v899 = vunpack.c.h.b16 %v252
    %v900 = vunpack.c.l.b16 %v253
    %v901 = vunpack.c.h.b16 %v253
    %v902 = vunpack.c.l.b16 %v254
    %v903 = vunpack.c.l.b16 %v255
    %v904 = vunpack.c.h.b16 %v255
    %v905 = vunpack.c.l.b16 %v256
    %v906 = vunpack.c.h.b16 %v256
    %v907 = vunpack.c.l.b16 %v257
    %v908 = vunpack.c.h.b16 %v257
    %v909 = vunpack.c.l.b16 %v258
    %v910 = vunpack.c.l.b16 %v259
    %v911 = vunpack.c.h.b16 %v259
    %v912 = vunpack.c.l.b16 %v260
    %v913 = vunpack.c.h.b16 %v260
    %v914 = vunpack.c.l.b16 %v261
    %v915 = vunpack.c.h.b16 %v261
    %v916 = vunpack.c.l.b16 %v262
    %v917 = vunpack.c.l.b16 %v263
    %v918 = vunpack.c.h.b16 %v263
    %v919 = vunpack.c.l.b16 %v264
    %v920 = vunpack.c.h.b16 %v264
    %v921 = vunpack.c.l.b16 %v265
    %v922 = vunpack.c.h.b16 %v265
    %v923 = vunpack.c.l.b16 %v266
    %v924 = vunpack.c.l.b16 %v267
    %v925 = vunpack.c.h.b16 %v267
    %v926 = vunpack.c.l.b16 %v268
    %v927 = vunpack.c.h.b16 %v268
    %v928 = vunpack.c.l.b16 %v269
    %v929 = vunpack.c.h.b16 %v269
    %v930 = vunpack.c.l.b16 %v270
    %v931 = vunpack.c.l.b16 %v271
    %v932 = vunpack.c.h.b16 %v271
    %v933 = vunpack.c.l.b16 %v272
    %v934 = vunpack.c.h.b16 %v272
    %v935 = vunpack.c.l.b16 %v273
    %v936 = vunpack.c.h.b16 %v273
    %v937 = vunpack.c.l.b16 %v274
    %v938 = vunpack.c.l.b16 %v275
    %v939 = vunpack.c.h.b16 %v275
    %v940 = vunpack.c.l.b16 %v276
    %v941 = vunpack.c.h.b16 %v276
    %v942 = vunpack.c.l.b16 %v277
    %v943 = vunpack.c.h.b16 %v277
    %v944 = vunpack.c.l.b16 %v278
    %v945 = vunpack.c.l.b16 %v279
    %v946 = vunpack.c.h.b16 %v279
    %v947 = vunpack.c.l.b16 %v280
    %v948 = vunpack.c.h.b16 %v280
    %v949 = vunpack.c.l.b16 %v281
    %v950 = vunpack.c.h.b16 %v281
    %v951 = vunpack.c.l.b16 %v282
    %v952 = vunpack.c.l.b16 %v283
    %v953 = vunpack.c.h.b16 %v283
    %v954 = vunpack.c.l.b16 %v284
    %v955 = vunpack.c.h.b16 %v284
    %v956 = vunpack.c.l.b16 %v285
    %v957 = vunpack.c.h.b16 %v285
    %v958 = vunpack.c.l.b16 %v286
    %v959 = vunpack.c.l.b16 %v287
    %v960 = vunpack.c.h.b16 %v287
    %v961 = vunpack.c.l.b16 %v288
    %v962 = vunpack.c.h.b16 %v288
    %v963 = vunpack.c.l.b16 %v289
    %v964 = vunpack.c.h.b16 %v289
    %v965 = vunpack.c.l.b16 %v290
    %v966 = vunpack.c.l.b16 %v291
    %v967 = vunpack.c.h.b16 %v291
    %v968 = vunpack.c.l.b16 %v292
    %v969 = vunpack.c.h.b16 %v292
    %v970 = vunpack.c.l.b16 %v293
    %v971 = vunpack.c.h.b16 %v293
    %v972 = vunpack.c.l.b16 %v294
    %v973 = vunpack.c.l.b16 %v295
    %v974 = vunpack.c.h.b16 %v295
    %v975 = vunpack.c.l.b16 %v296
    %v976 = vunpack.c.h.b16 %v296
    %v977 = vunpack.c.l.b16 %v297
    %v978 = vunpack.c.h.b16 %v297
    %v979 = vunpack.c.l.b16 %v298
    %v980 = vunpack.c.l.b16 %v299
    %v981 = vunpack.c.h.b16 %v299
    %v982 = vunpack.c.l.b16 %v300
    %v983 = vunpack.c.h.b16 %v300
    %v984 = vunpack.c.l.b16 %v301
    %v985 = vunpack.c.h.b16 %v301
    %v986 = vunpack.c.l.b16 %v302
    %v987 = vunpack.c.l.b16 %v303
    %v988 = vunpack.c.h.b16 %v303
    %v989 = vunpack.c.l.b16 %v304
    %v990 = vunpack.c.h.b16 %v304
    %v991 = vunpack.c.l.b16 %v305
    %v992 = vunpack.c.h.b16 %v305
    %v993 = vunpack.c.l.b16 %v306
    %v994 = vunpack.c.l.b16 %v307
    %v995 = vunpack.c.h.b16 %v307
    %v996 = vunpack.c.l.b16 %v308
    %v997 = vunpack.c.h.b16 %v308
    %v998 = vunpack.c.l.b16 %v309
    %v999 = vunpack.c.h.b16 %v309
    %v1000 = vunpack.c.l.b16 %v310
    %v1001 = vunpack.c.l.b16 %v311
    %v1002 = vunpack.c.h.b16 %v311
    %v1003 = vunpack.c.l.b16 %v312
    %v1004 = vunpack.c.h.b16 %v312
    %v1005 = vunpack.c.l.b16 %v313
    %v1006 = vunpack.c.h.b16 %v313
    %v1007 = vunpack.c.l.b16 %v314
    %v1008 = vunpack.c.l.b16 %v315
    %v1009 = vunpack.c.h.b16 %v315
    %v1010 = vunpack.c.l.b16 %v316
    %v1011 = vunpack.c.h.b16 %v316
    %v1012 = vunpack.c.l.b16 %v317
    %v1013 = vunpack.c.h.b16 %v317
    %v1014 = vunpack.c.l.b16 %v318
    %v1015 = vunpack.c.l.b16 %v319
    %v1016 = vunpack.c.h.b16 %v319
    %v1017 = vunpack.c.l.b16 %v320
    %v1018 = vunpack.c.h.b16 %v320
    %v1019 = vunpack.c.l.b16 %v321
    %v1020 = vunpack.c.h.b16 %v321
    %v1021 = vunpack.c.l.b16 %v322
    %v1022 = vunpack.c.l.b16 %v323
    %v1023 = vunpack.c.h.b16 %v323
    %v1024 = vunpack.c.l.b16 %v324
    %v1025 = vunpack.c.h.b16 %v324
    %v1026 = vunpack.c.l.b16 %v325
    %v1027 = vunpack.c.h.b16 %v325
    %v1028 = vunpack.c.l.b16 %v326
    %v1029 = vunpack.c.l.b16 %v327
    %v1030 = vunpack.c.h.b16 %v327
    %v1031 = vunpack.c.l.b16 %v328
    %v1032 = vunpack.c.h.b16 %v328
    %v1033 = vunpack.c.l.b16 %v329
    %v1034 = vunpack.c.h.b16 %v329
    %v1035 = vunpack.c.l.b16 %v330
    %v1036 = vunpack.c.l.b16 %v331
    %v1037 = vunpack.c.h.b16 %v331
    %v1038 = vunpack.c.l.b16 %v332
    %v1039 = vunpack.c.h.b16 %v332
    %v1040 = vunpack.c.l.b16 %v333
    %v1041 = vunpack.c.h.b16 %v333
    %v1042 = vunpack.c.l.b16 %v334
    %v1043 = vunpack.c.l.b16 %v335
    %v1044 = vunpack.c.h.b16 %v335
    %v1045 = vunpack.c.l.b16 %v336
    %v1046 = vunpack.c.h.b16 %v336
    %v1047 = vunpack.c.l.b16 %v337
    %v1048 = vunpack.c.h.b16 %v337
    %v1049 = vunpack.c.l.b16 %v338
    %v1050 = vunpack.c.l.b16 %v339
    %v1051 = vunpack.c.h.b16 %v339
    %v1052 = vunpack.c.l.b16 %v340
    %v1053 = vunpack.c.h.b16 %v340
    %v1054 = vunpack.c.l.b16 %v341
    %v1055 = vunpack.c.h.b16 %v341
    %v1056 = vunpack.c.l.b16 %v342
    %v1057 = vunpack.c.l.b16 %v343
    %v1058 = vunpack.c.h.b16 %v343
    %v1059 = vunpack.c.l.b16 %v344
    %v1060 = vunpack.c.h.b16 %v344
    %v1061 = vunpack.c.l.b16 %v345
    %v1062 = vunpack.c.h.b16 %v345
    %v1063 = vunpack.c.l.b16 %v346
    %v1064 = vunpack.c.l.b16 %v347
    %v1065 = vunpack.c.h.b16 %v347
    %v1066 = vunpack.c.l.b16 %v348
    %v1067 = vunpack.c.h.b16 %v348
    %v1068 = vunpack.c.l.b16 %v349
    %v1069 = vunpack.c.h.b16 %v349
    %v1070 = vunpack.c.l.b16 %v350
    %v1071 = vunpack.c.l.b16 %v351
    %v1072 = vunpack.c.h.b16 %v351
    %v1073 = vunpack.c.l.b16 %v352
    %v1074 = vunpack.c.h.b16 %v352
    %v1075 = vunpack.c.l.b16 %v353
    %v1076 = vunpack.c.h.b16 %v353
    %v1077 = vunpack.c.l.b16 %v354
    %v1078 = vunpack.c.l.b16 %v355
    %v1079 = vunpack.c.h.b16 %v355
    %v1080 = vunpack.c.l.b16 %v356
    %v1081 = vunpack.c.h.b16 %v356
    %v1082 = vunpack.c.l.b16 %v357
    %v1083 = vunpack.c.h.b16 %v357
    %v1084 = vunpack.c.l.b16 %v358
    %v1085 = vunpack.c.l.b16 %v359
    %v1086 = vunpack.c.h.b16 %v359
    %v1087 = vunpack.c.l.b16 %v360
    %v1088 = vunpack.c.h.b16 %v360
    %v1089 = vunpack.c.l.b16 %v361
    %v1090 = vunpack.c.h.b16 %v361
    %v1091 = vunpack.c.l.b16 %v362
    %v1092 = vunpack.c.l.b16 %v363
    %v1093 = vunpack.c.h.b16 %v363
    %v1094 = vunpack.c.l.b16 %v364
    %v1095 = vunpack.c.h.b16 %v364
    %v1096 = vunpack.c.l.b16 %v365
    %v1097 = vunpack.c.h.b16 %v365
    %v1098 = vunpack.c.l.b16 %v366
    %v1099 = vunpack.c.l.b16 %v367
    %v1100 = vunpack.c.h.b16 %v367
    %v1101 = vunpack.c.l.b16 %v368
    %v1102 = vunpack.c.h.b16 %v368
    %v1103 = vunpack.c.l.b16 %v369
    %v1104 = vunpack.c.h.b16 %v369
    %v1105 = vunpack.c.l.b16 %v370
    %v1106 = vunpack.c.l.b16 %v371
    %v1107 = vunpack.c.h.b16 %v371
    %v1108 = vunpack.c.l.b16 %v372
    %v1109 = vunpack.c.h.b16 %v372
    %v1110 = vunpack.c.l.b16 %v373
    %v1111 = vunpack.c.h.b16 %v373
    %v1112 = vunpack.c.l.b16 %v374
    %v1113 = vunpack.c.l.b16 %v375
    %v1114 = vunpack.c.h.b16 %v375
    %v1115 = vunpack.c.l.b16 %v376
    %v1116 = vunpack.c.h.b16 %v376
    %v1117 = vunpack.c.l.b16 %v377
    %v1118 = vunpack.c.h.b16 %v377
    %v1119 = vunpack.c.l.b16 %v378
    %v1120 = vpack.c.b16 %v679, %v672
    %v1121 = vpack.c.b16 %v680, %v673
    %v1122 = vpack.c.b16 %v681, %v674
    %v1123 = vpack.c.b16 %v682, %v675
    %v1124 = vpack.c.b16 %v683, %v676
    %v1125 = vpack.c.b16 %v684, %v677
    %v1126 = vpack.c.b16 %v685, %v678
    %v1127 = vpack.c.b16 %v693, %v686
    %v1128 = vpack.c.b16 %v694, %v687
    %v1129 = vpack.c.b16 %v695, %v688
    %v1130 = vpack.c.b16 %v696, %v689
    %v1131 = vpack.c.b16 %v697, %v690
    %v1132 = vpack.c.b16 %v698, %v691
    %v1133 = vpack.c.b16 %v699, %v692
    %v1134 = vpack.c.b16 %v707, %v700
    %v1135 = vpack.c.b16 %v708, %v701
    %v1136 = vpack.c.b16 %v709, %v702
    %v1137 = vpack.c.b16 %v710, %v703
    %v1138 = vpack.c.b16 %v711, %v704
    %v1139 = vpack.c.b16 %v712, %v705
    %v1140 = vpack.c.b16 %v713, %v706
    %v1141 = vpack.c.b16 %v721, %v714
    %v1142 = vpack.c.b16 %v722, %v715
    %v1143 = vpack.c.b16 %v723, %v716
    %v1144 = vpack.c.b16 %v724, %v717
    %v1145 = vpack.c.b16 %v725, %v718
    %v1146 = vpack.c.b16 %v726, %v719
    %v1147 = vpack.c.b16 %v727, %v720
    %v1148 = vpack.c.b16 %v735, %v728
    %v1149 = vpack.c.b16 %v736, %v729
    %v1150 = vpack.c.b16 %v737, %v730
    %v1151 = vpack.c.b16 %v738, %v731
    %v1152 = vpack.c.b16 %v739, %v732
    %v1153 = vpack.c.b16 %v740, %v733
    %v1154 = vpack.c.b16 %v741, %v734
    %v1155 = vpack.c.b16 %v749, %v742
    %v1156 = vpack.c.b16 %v750, %v743
    %v1157 = vpack.c.b16 %v751, %v744
    %v1158 = vpack.c.b16 %v752, %v745
    %v1159 = vpack.c.b16 %v753, %v746
    %v1160 = vpack.c.b16 %v754, %v747
    %v1161 = vpack.c.b16 %v755, %v748
    %v1162 = vpack.c.b16 %v763, %v756
    %v1163 = vpack.c.b16 %v764, %v757
    %v1164 = vpack.c.b16 %v765, %v758
    %v1165 = vpack.c.b16 %v766, %v759
    %v1166 = vpack.c.b16 %v767, %v760
    %v1167 = vpack.c.b16 %v768, %v761
    %v1168 = vpack.c.b16 %v769, %v762
    %v1169 = vpack.c.b16 %v777, %v770
    %v1170 = vpack.c.b16 %v778, %v771
    %v1171 = vpack.c.b16 %v779, %v772
    %v1172 = vpack.c.b16 %v780, %v773
    %v1173 = vpack.c.b16 %v781, %v774
    %v1174 = vpack.c.b16 %v782, %v775
    %v1175 = vpack.c.b16 %v783, %v776
    %v1176 = vpack.c.b16 %v791, %v784
    %v1177 = vpack.c.b16 %v792, %v785
    %v1178 = vpack.c.b16 %v793, %v786
    %v1179 = vpack.c.b16 %v794, %v787
    %v1180 = vpack.c.b16 %v795, %v788
    %v1181 = vpack.c.b16 %v796, %v789
    %v1182 = vpack.c.b16 %v797, %v790
    %v1183 = vpack.c.b16 %v805, %v798
    %v1184 = vpack.c.b16 %v806, %v799
    %v1185 = vpack.c.b16 %v807, %v800
    %v1186 = vpack.c.b16 %v808, %v801
    %v1187 = vpack.c.b16 %v809, %v802
    %v1188 = vpack.c.b16 %v810, %v803
    %v1189 = vpack.c.b16 %v811, %v804
    %v1190 = vpack.c.b16 %v819, %v812
    %v1191 = vpack.c.b16 %v820, %v813
    %v1192 = vpack.c.b16 %v821, %v814
    %v1193 = vpack.c.b16 %v822, %v815
    %v1194 = vpack.c.b16 %v823, %v816
    %v1195 = vpack.c.b16 %v824, %v817
    %v1196 = vpack.c.b16 %v825, %v818
    %v1197 = vpack.c.b16 %v833, %v826
    %v1198 = vpack.c.b16 %v834, %v827
    %v1199 = vpack.c.b16 %v835, %v828
    %v1200 = vpack.c.b16 %v836, %v829
    %v1201 = vpack.c.b16 %v837, %v830
    %v1202 = vpack.c.b16 %v838, %v831
    %v1203 = vpack.c.b16 %v839, %v832
    %v1204 = vpack.c.b16 %v847, %v840
    %v1205 = vpack.c.b16 %v848, %v841
    %v1206 = vpack.c.b16 %v849, %v842
    %v1207 = vpack.c.b16 %v850, %v843
    %v1208 = vpack.c.b16 %v851, %v844
    %v1209 = vpack.c.b16 %v852, %v845
    %v1210 = vpack.c.b16 %v853, %v846
    %v1211 = vpack.c.b16 %v861, %v854
    %v1212 = vpack.c.b16 %v862, %v855
    %v1213 = vpack.c.b16 %v863, %v856
    %v1214 = vpack.c.b16 %v864, %v857
    %v1215 = vpack.c.b16 %v865, %v858
    %v1216 = vpack.c.b16 %v866, %v859
    %v1217 = vpack.c.b16 %v867, %v860
    %v1218 = vpack.c.b16 %v875, %v868
    %v1219 = vpack.c.b16 %v876, %v869
    %v1220 = vpack.c.b16 %v877, %v870
    %v1221 = vpack.c.b16 %v878, %v871
    %v1222 = vpack.c.b16 %v879, %v872
    %v1223 = vpack.c.b16 %v880, %v873
    %v1224 = vpack.c.b16 %v881, %v874
    %v1225 = vpack.c.b16 %v889, %v882
    %v1226 = vpack.c.b16 %v890, %v883
    %v1227 = vpack.c.b16 %v891, %v884
    %v1228 = vpack.c.b16 %v892, %v885
    %v1229 = vpack.c.b16 %v893, %v886
    %v1230 = vpack.c.b16 %v894, %v887
    %v1231 = vpack.c.b16 %v895, %v888
    %v1232 = vpack.c.b16 %v903, %v896
    %v1233 = vpack.c.b16 %v904, %v897
    %v1234 = vpack.c.b16 %v905, %v898
    %v1235 = vpack.c.b16 %v906, %v899
    %v1236 = vpack.c.b16 %v907, %v900
    %v1237 = vpack.c.b16 %v908, %v901
    %v1238 = vpack.c.b16 %v909, %v902
    %v1239 = vpack.c.b16 %v917, %v910
    %v1240 = vpack.c.b16 %v918, %v911
    %v1241 = vpack.c.b16 %v919, %v912
    %v1242 = vpack.c.b16 %v920, %v913
    %v1243 = vpack.c.b16 %v921, %v914
    %v1244 = vpack.c.b16 %v922, %v915
    %v1245 = vpack.c.b16 %v923, %v916
    %v1246 = vpack.c.b16 %v931, %v924
    %v1247 = vpack.c.b16 %v932, %v925
    %v1248 = vpack.c.b16 %v933, %v926
    %v1249 = vpack.c.b16 %v934, %v927
    %v1250 = vpack.c.b16 %v935, %v928
    %v1251 = vpack.c.b16 %v936, %v929
    %v1252 = vpack.c.b16 %v937, %v930
    %v1253 = vpack.c.b16 %v945, %v938
    %v1254 = vpack.c.b16 %v946, %v939
    %v1255 = vpack.c.b16 %v947, %v940
    %v1256 = vpack.c.b16 %v948, %v941
    %v1257 = vpack.c.b16 %v949, %v942
    %v1258 = vpack.c.b16 %v950, %v943
    %v1259 = vpack.c.b16 %v951, %v944
    %v1260 = vpack.c.b16 %v959, %v952
    %v1261 = vpack.c.b16 %v960, %v953
    %v1262 = vpack.c.b16 %v961, %v954
    %v1263 = vpack.c.b16 %v962, %v955
    %v1264 = vpack.c.b16 %v963, %v956
    %v1265 = vpack.c.b16 %v964, %v957
    %v1266 = vpack.c.b16 %v965, %v958
    %v1267 = vpack.c.b16 %v973, %v966
    %v1268 = vpack.c.b16 %v974, %v967
    %v1269 = vpack.c.b16 %v975, %v968
    %v1270 = vpack.c.b16 %v976, %v969
    %v1271 = vpack.c.b16 %v977, %v970
    %v1272 = vpack.c.b16 %v978, %v971
    %v1273 = vpack.c.b16 %v979, %v972
    %v1274 = vpack.c.b16 %v987, %v980
    %v1275 = vpack.c.b16 %v988, %v981
    %v1276 = vpack.c.b16 %v989, %v982
    %v1277 = vpack.c.b16 %v990, %v983
    %v1278 = vpack.c.b16 %v991, %v984
    %v1279 = vpack.c.b16 %v992, %v985
    %v1280 = vpack.c.b16 %v993, %v986
    %v1281 = vpack.c.b16 %v1001, %v994
    %v1282 = vpack.c.b16 %v1002, %v995
    %v1283 = vpack.c.b16 %v1003, %v996
    %v1284 = vpack.c.b16 %v1004, %v997
    %v1285 = vpack.c.b16 %v1005, %v998
    %v1286 = vpack.c.b16 %v1006, %v999
    %v1287 = vpack.c.b16 %v1007, %v1000
    %v1288 = vpack.c.b16 %v1015, %v1008
    %v1289 = vpack.c.b16 %v1016, %v1009
    %v1290 = vpack.c.b16 %v1017, %v1010
    %v1291 = vpack.c.b16 %v1018, %v1011
    %v1292 = vpack.c.b16 %v1019, %v1012
    %v1293 = vpack.c.b16 %v1020, %v1013
    %v1294 = vpack.c.b16 %v1021, %v1014
    %v1295 = vpack.c.b16 %v1029, %v1022
    %v1296 = vpack.c.b16 %v1030, %v1023
    %v1297 = vpack.c.b16 %v1031, %v1024
    %v1298 = vpack.c.b16 %v1032, %v1025
    %v1299 = vpack.c.b16 %v1033, %v1026
    %v1300 = vpack.c.b16 %v1034, %v1027
    %v1301 = vpack.c.b16 %v1035, %v1028
    %v1302 = vpack.c.b16 %v1043, %v1036
    %v1303 = vpack.c.b16 %v1044, %v1037
    %v1304 = vpack.c.b16 %v1045, %v1038
    %v1305 = vpack.c.b16 %v1046, %v1039
    %v1306 = vpack.c.b16 %v1047, %v1040
    %v1307 = vpack.c.b16 %v1048, %v1041
    %v1308 = vpack.c.b16 %v1049, %v1042
    %v1309 = vpack.c.b16 %v1057, %v1050
    %v1310 = vpack.c.b16 %v1058, %v1051
    %v1311 = vpack.c.b16 %v1059, %v1052
    %v1312 = vpack.c.b16 %v1060, %v1053
    %v1313 = vpack.c.b16 %v1061, %v1054
    %v1314 = vpack.c.b16 %v1062, %v1055
    %v1315 = vpack.c.b16 %v1063, %v1056
    %v1316 = vpack.c.b16 %v1071, %v1064
    %v1317 = vpack.c.b16 %v1072, %v1065
    %v1318 = vpack.c.b16 %v1073, %v1066
    %v1319 = vpack.c.b16 %v1074, %v1067
    %v1320 = vpack.c.b16 %v1075, %v1068
    %v1321 = vpack.c.b16 %v1076, %v1069
    %v1322 = vpack.c.b16 %v1077, %v1070
    %v1323 = vpack.c.b16 %v1085, %v1078
    %v1324 = vpack.c.b16 %v1086, %v1079
    %v1325 = vpack.c.b16 %v1087, %v1080
    %v1326 = vpack.c.b16 %v1088, %v1081
    %v1327 = vpack.c.b16 %v1089, %v1082
    %v1328 = vpack.c.b16 %v1090, %v1083
    %v1329 = vpack.c.b16 %v1091, %v1084
    %v1330 = vpack.c.b16 %v1099, %v1092
    %v1331 = vpack.c.b16 %v1100, %v1093
    %v1332 = vpack.c.b16 %v1101, %v1094
    %v1333 = vpack.c.b16 %v1102, %v1095
    %v1334 = vpack.c.b16 %v1103, %v1096
    %v1335 = vpack.c.b16 %v1104, %v1097
    %v1336 = vpack.c.b16 %v1105, %v1098
    %v1337 = vpack.c.b16 %v1113, %v1106
    %v1338 = vpack.c.b16 %v1114, %v1107
    %v1339 = vpack.c.b16 %v1115, %v1108
    %v1340 = vpack.c.b16 %v1116, %v1109
    %v1341 = vpack.c.b16 %v1117, %v1110
    %v1342 = vpack.c.b16 %v1118, %v1111
    %v1343 = vpack.c.b16 %v1119, %v1112
    %1568 = vmatprep.subr.bf16.mxu0 %v1121
    %1569 = vmatpush1.bf16.msra.mxu0 %v1120
    %1570 = vmatprep.subr.bf16.mxu0 %v1128
    %1571 = vmatpush1.bf16.msra.mxu0 %v1127
    %1572 = vmatprep.subr.bf16.mxu0 %v1135
    %1573 = vmatpush1.bf16.msra.mxu0 %v1134
    %1574 = vmatprep.subr.bf16.mxu0 %v1142
    %1575 = vmatpush1.bf16.msra.mxu0 %v1141
    %1576 = vmatprep.subr.bf16.mxu0 %v1149
    %1577 = vmatpush1.bf16.msra.mxu0 %v1148
    %1578 = vmatprep.subr.bf16.mxu0 %v1156
    %1579 = vmatpush1.bf16.msra.mxu0 %v1155
    %1580 = vmatprep.subr.bf16.mxu0 %v1163
    %1581 = vmatpush1.bf16.msra.mxu0 %v1162
    %1582 = vmatprep.subr.bf16.mxu0 %v1170
    %1583 = vmatpush1.bf16.msra.mxu0 %v1169
    %1584 = vmatprep.subr.bf16.mxu0 %v1177
    %1585 = vmatpush1.bf16.msra.mxu0 %v1176
    %1586 = vmatprep.subr.bf16.mxu0 %v1184
    %1587 = vmatpush1.bf16.msra.mxu0 %v1183
    %1588 = vmatprep.subr.bf16.mxu0 %v1191
    %1589 = vmatpush1.bf16.msra.mxu0 %v1190
    %1590 = vmatprep.subr.bf16.mxu0 %v1198
    %1591 = vmatpush1.bf16.msra.mxu0 %v1197
    %1592 = vmatprep.subr.bf16.mxu0 %v1205
    %1593 = vmatpush1.bf16.msra.mxu0 %v1204
    %1594 = vmatprep.subr.bf16.mxu0 %v1212
    %1595 = vmatpush1.bf16.msra.mxu0 %v1211
    %1596 = vmatprep.subr.bf16.mxu0 %v1219
    %1597 = vmatpush1.bf16.msra.mxu0 %v1218
    %1598 = vmatprep.subr.bf16.mxu0 %v1226
    %1599 = vmatpush1.bf16.msra.mxu0 %v1225
    %1600 = vmatprep.mubr.bf16.mxu0 %v120
    %1601 = vmatmul.mubr.bf16.gmra.mrb[0].mxu0 %v119
    %v1602 = vpop.f32.mrb[0].mxu0
    %v1603 = vadd.f32 %v384, %v1602
    %v1604 = vpop.f32.mrb[0].mxu0
    %v1605 = vadd.f32 %v388, %v1604
    %v1606 = vpop.f32.mrb[0].mxu0
    %v1607 = vpop.f32.mrb[0].mxu0
    %1608 = vdwg.mxu0
    %1609 = vmatprep.subr.bf16.mxu0 %v1233
    %1610 = vmatpush1.bf16.msra.mxu0 %v1232
    %1611 = vmatprep.subr.bf16.mxu0 %v1240
    %1612 = vmatpush1.bf16.msra.mxu0 %v1239
    %1613 = vmatprep.subr.bf16.mxu0 %v1247
    %1614 = vmatpush1.bf16.msra.mxu0 %v1246
    %1615 = vmatprep.subr.bf16.mxu0 %v1254
    %1616 = vmatpush1.bf16.msra.mxu0 %v1253
    %1617 = vmatprep.subr.bf16.mxu0 %v1261
    %1618 = vmatpush1.bf16.msra.mxu0 %v1260
    %1619 = vmatprep.subr.bf16.mxu0 %v1268
    %1620 = vmatpush1.bf16.msra.mxu0 %v1267
    %1621 = vmatprep.subr.bf16.mxu0 %v1275
    %1622 = vmatpush1.bf16.msra.mxu0 %v1274
    %1623 = vmatprep.subr.bf16.mxu0 %v1282
    %1624 = vmatpush1.bf16.msra.mxu0 %v1281
    %1625 = vmatprep.subr.bf16.mxu0 %v1289
    %1626 = vmatpush1.bf16.msra.mxu0 %v1288
    %1627 = vmatprep.subr.bf16.mxu0 %v1296
    %1628 = vmatpush1.bf16.msra.mxu0 %v1295
    %1629 = vmatprep.subr.bf16.mxu0 %v1303
    %1630 = vmatpush1.bf16.msra.mxu0 %v1302
    %1631 = vmatprep.subr.bf16.mxu0 %v1310
    %1632 = vmatpush1.bf16.msra.mxu0 %v1309
    %1633 = vmatprep.subr.bf16.mxu0 %v1317
    %1634 = vmatpush1.bf16.msra.mxu0 %v1316
    %1635 = vmatprep.subr.bf16.mxu0 %v1324
    %1636 = vmatpush1.bf16.msra.mxu0 %v1323
    %1637 = vmatprep.subr.bf16.mxu0 %v1331
    %1638 = vmatpush1.bf16.msra.mxu0 %v1330
    %1639 = vmatprep.subr.bf16.mxu0 %v1338
    %1640 = vmatpush1.bf16.msra.mxu0 %v1337
    %1641 = vmatprep.mubr.bf16.mxu0 %v122
    %1642 = vmatmul.mubr.bf16.gmra.mrb[0].mxu0 %v121
    %v1643 = vpop.f32.mrb[0].mxu0
    %v1644 = vadd.f32 %v1603, %v1643
    %v1645 = vpop.f32.mrb[0].mxu0
    %v1646 = vadd.f32 %v1605, %v1645
    %v1647 = vpop.f32.mrb[0].mxu0
    %v1648 = vpop.f32.mrb[0].mxu0
    %1649 = vdwg.mxu0
    %1650 = vmatprep.subr.bf16.mxu0 %v1123
    %1651 = vmatpush1.bf16.msra.mxu0 %v1122
    %1652 = vmatprep.subr.bf16.mxu0 %v1130
    %1653 = vmatpush1.bf16.msra.mxu0 %v1129
    %1654 = vmatprep.subr.bf16.mxu0 %v1137
    %1655 = vmatpush1.bf16.msra.mxu0 %v1136
    %1656 = vmatprep.subr.bf16.mxu0 %v1144
    %1657 = vmatpush1.bf16.msra.mxu0 %v1143
    %1658 = vmatprep.subr.bf16.mxu0 %v1151
    %1659 = vmatpush1.bf16.msra.mxu0 %v1150
    %1660 = vmatprep.subr.bf16.mxu0 %v1158
    %1661 = vmatpush1.bf16.msra.mxu0 %v1157
    %1662 = vmatprep.subr.bf16.mxu0 %v1165
    %1663 = vmatpush1.bf16.msra.mxu0 %v1164
    %1664 = vmatprep.subr.bf16.mxu0 %v1172
    %1665 = vmatpush1.bf16.msra.mxu0 %v1171
    %1666 = vmatprep.subr.bf16.mxu0 %v1179
    %1667 = vmatpush1.bf16.msra.mxu0 %v1178
    %1668 = vmatprep.subr.bf16.mxu0 %v1186
    %1669 = vmatpush1.bf16.msra.mxu0 %v1185
    %1670 = vmatprep.subr.bf16.mxu0 %v1193
    %1671 = vmatpush1.bf16.msra.mxu0 %v1192
    %1672 = vmatprep.subr.bf16.mxu0 %v1200
    %1673 = vmatpush1.bf16.msra.mxu0 %v1199
    %1674 = vmatprep.subr.bf16.mxu0 %v1207
    %1675 = vmatpush1.bf16.msra.mxu0 %v1206
    %1676 = vmatprep.subr.bf16.mxu0 %v1214
    %1677 = vmatpush1.bf16.msra.mxu0 %v1213
    %1678 = vmatprep.subr.bf16.mxu0 %v1221
    %1679 = vmatpush1.bf16.msra.mxu0 %v1220
    %1680 = vmatprep.subr.bf16.mxu0 %v1228
    %1681 = vmatpush1.bf16.msra.mxu0 %v1227
    %1682 = vmatprep.mubr.bf16.mxu0 %v120
    %1683 = vmatmul.mubr.bf16.gmra.mrb[0].mxu0 %v119
    %v1684 = vpop.f32.mrb[0].mxu0
    %v1685 = vadd.f32 %v392, %v1684
    %v1686 = vpop.f32.mrb[0].mxu0
    %v1687 = vadd.f32 %v396, %v1686
    %v1688 = vpop.f32.mrb[0].mxu0
    %v1689 = vpop.f32.mrb[0].mxu0
    %1690 = vdwg.mxu0
    %1691 = vmatprep.subr.bf16.mxu0 %v1235
    %1692 = vmatpush1.bf16.msra.mxu0 %v1234
    %1693 = vmatprep.subr.bf16.mxu0 %v1242
    %1694 = vmatpush1.bf16.msra.mxu0 %v1241
    %1695 = vmatprep.subr.bf16.mxu0 %v1249
    %1696 = vmatpush1.bf16.msra.mxu0 %v1248
    %1697 = vmatprep.subr.bf16.mxu0 %v1256
    %1698 = vmatpush1.bf16.msra.mxu0 %v1255
    %1699 = vmatprep.subr.bf16.mxu0 %v1263
    %1700 = vmatpush1.bf16.msra.mxu0 %v1262
    %1701 = vmatprep.subr.bf16.mxu0 %v1270
    %1702 = vmatpush1.bf16.msra.mxu0 %v1269
    %1703 = vmatprep.subr.bf16.mxu0 %v1277
    %1704 = vmatpush1.bf16.msra.mxu0 %v1276
    %1705 = vmatprep.subr.bf16.mxu0 %v1284
    %1706 = vmatpush1.bf16.msra.mxu0 %v1283
    %1707 = vmatprep.subr.bf16.mxu0 %v1291
    %1708 = vmatpush1.bf16.msra.mxu0 %v1290
    %1709 = vmatprep.subr.bf16.mxu0 %v1298
    %1710 = vmatpush1.bf16.msra.mxu0 %v1297
    %1711 = vmatprep.subr.bf16.mxu0 %v1305
    %1712 = vmatpush1.bf16.msra.mxu0 %v1304
    %1713 = vmatprep.subr.bf16.mxu0 %v1312
    %1714 = vmatpush1.bf16.msra.mxu0 %v1311
    %1715 = vmatprep.subr.bf16.mxu0 %v1319
    %1716 = vmatpush1.bf16.msra.mxu0 %v1318
    %1717 = vmatprep.subr.bf16.mxu0 %v1326
    %1718 = vmatpush1.bf16.msra.mxu0 %v1325
    %1719 = vmatprep.subr.bf16.mxu0 %v1333
    %1720 = vmatpush1.bf16.msra.mxu0 %v1332
    %1721 = vmatprep.subr.bf16.mxu0 %v1340
    %1722 = vmatpush1.bf16.msra.mxu0 %v1339
    %1723 = vmatprep.mubr.bf16.mxu0 %v122
    %1724 = vmatmul.mubr.bf16.gmra.mrb[0].mxu0 %v121
    %v1725 = vpop.f32.mrb[0].mxu0
    %v1726 = vadd.f32 %v1685, %v1725
    %v1727 = vpop.f32.mrb[0].mxu0
    %v1728 = vadd.f32 %v1687, %v1727
    %v1729 = vpop.f32.mrb[0].mxu0
    %v1730 = vpop.f32.mrb[0].mxu0
    %1731 = vdwg.mxu0
    %1732 = vmatprep.subr.bf16.mxu0 %v1125
    %1733 = vmatpush1.bf16.msra.mxu0 %v1124
    %1734 = vmatprep.subr.bf16.mxu0 %v1132
    %1735 = vmatpush1.bf16.msra.mxu0 %v1131
    %1736 = vmatprep.subr.bf16.mxu0 %v1139
    %1737 = vmatpush1.bf16.msra.mxu0 %v1138
    %1738 = vmatprep.subr.bf16.mxu0 %v1146
    %1739 = vmatpush1.bf16.msra.mxu0 %v1145
    %1740 = vmatprep.subr.bf16.mxu0 %v1153
    %1741 = vmatpush1.bf16.msra.mxu0 %v1152
    %1742 = vmatprep.subr.bf16.mxu0 %v1160
    %1743 = vmatpush1.bf16.msra.mxu0 %v1159
    %1744 = vmatprep.subr.bf16.mxu0 %v1167
    %1745 = vmatpush1.bf16.msra.mxu0 %v1166
    %1746 = vmatprep.subr.bf16.mxu0 %v1174
    %1747 = vmatpush1.bf16.msra.mxu0 %v1173
    %1748 = vmatprep.subr.bf16.mxu0 %v1181
    %1749 = vmatpush1.bf16.msra.mxu0 %v1180
    %1750 = vmatprep.subr.bf16.mxu0 %v1188
    %1751 = vmatpush1.bf16.msra.mxu0 %v1187
    %1752 = vmatprep.subr.bf16.mxu0 %v1195
    %1753 = vmatpush1.bf16.msra.mxu0 %v1194
    %1754 = vmatprep.subr.bf16.mxu0 %v1202
    %1755 = vmatpush1.bf16.msra.mxu0 %v1201
    %1756 = vmatprep.subr.bf16.mxu0 %v1209
    %1757 = vmatpush1.bf16.msra.mxu0 %v1208
    %1758 = vmatprep.subr.bf16.mxu0 %v1216
    %1759 = vmatpush1.bf16.msra.mxu0 %v1215
    %1760 = vmatprep.subr.bf16.mxu0 %v1223
    %1761 = vmatpush1.bf16.msra.mxu0 %v1222
    %1762 = vmatprep.subr.bf16.mxu0 %v1230
    %1763 = vmatpush1.bf16.msra.mxu0 %v1229
    %1764 = vmatprep.mubr.bf16.mxu0 %v120
    %1765 = vmatmul.mubr.bf16.gmra.mrb[0].mxu0 %v119
    %v1766 = vpop.f32.mrb[0].mxu0
    %v1767 = vadd.f32 %v400, %v1766
    %v1768 = vpop.f32.mrb[0].mxu0
    %v1769 = vadd.f32 %v404, %v1768
    %v1770 = vpop.f32.mrb[0].mxu0
    %v1771 = vpop.f32.mrb[0].mxu0
    %1772 = vdwg.mxu0
    %1773 = vmatprep.subr.bf16.mxu0 %v1237
    %1774 = vmatpush1.bf16.msra.mxu0 %v1236
    %1775 = vmatprep.subr.bf16.mxu0 %v1244
    %1776 = vmatpush1.bf16.msra.mxu0 %v1243
    %1777 = vmatprep.subr.bf16.mxu0 %v1251
    %1778 = vmatpush1.bf16.msra.mxu0 %v1250
    %1779 = vmatprep.subr.bf16.mxu0 %v1258
    %1780 = vmatpush1.bf16.msra.mxu0 %v1257
    %1781 = vmatprep.subr.bf16.mxu0 %v1265
    %1782 = vmatpush1.bf16.msra.mxu0 %v1264
    %1783 = vmatprep.subr.bf16.mxu0 %v1272
    %1784 = vmatpush1.bf16.msra.mxu0 %v1271
    %1785 = vmatprep.subr.bf16.mxu0 %v1279
    %1786 = vmatpush1.bf16.msra.mxu0 %v1278
    %1787 = vmatprep.subr.bf16.mxu0 %v1286
    %1788 = vmatpush1.bf16.msra.mxu0 %v1285
    %1789 = vmatprep.subr.bf16.mxu0 %v1293
    %1790 = vmatpush1.bf16.msra.mxu0 %v1292
    %1791 = vmatprep.subr.bf16.mxu0 %v1300
    %1792 = vmatpush1.bf16.msra.mxu0 %v1299
    %1793 = vmatprep.subr.bf16.mxu0 %v1307
    %1794 = vmatpush1.bf16.msra.mxu0 %v1306
    %1795 = vmatprep.subr.bf16.mxu0 %v1314
    %1796 = vmatpush1.bf16.msra.mxu0 %v1313
    %1797 = vmatprep.subr.bf16.mxu0 %v1321
    %1798 = vmatpush1.bf16.msra.mxu0 %v1320
    %1799 = vmatprep.subr.bf16.mxu0 %v1328
    %1800 = vmatpush1.bf16.msra.mxu0 %v1327
    %1801 = vmatprep.subr.bf16.mxu0 %v1335
    %1802 = vmatpush1.bf16.msra.mxu0 %v1334
    %1803 = vmatprep.subr.bf16.mxu0 %v1342
    %1804 = vmatpush1.bf16.msra.mxu0 %v1341
    %1805 = vmatprep.mubr.bf16.mxu0 %v122
    %1806 = vmatmul.mubr.bf16.gmra.mrb[0].mxu0 %v121
    %v1807 = vpop.f32.mrb[0].mxu0
    %v1808 = vadd.f32 %v1767, %v1807
    %v1809 = vpop.f32.mrb[0].mxu0
    %v1810 = vadd.f32 %v1769, %v1809
    %v1811 = vpop.f32.mrb[0].mxu0
    %v1812 = vpop.f32.mrb[0].mxu0
    %1813 = vdwg.mxu0
    %1814 = vmatprep.subr.bf16.mxu0 0
    %1815 = vmatpush1.bf16.msra.mxu0 %v1126
    %1816 = vmatprep.subr.bf16.mxu0 0
    %1817 = vmatpush1.bf16.msra.mxu0 %v1133
    %1818 = vmatprep.subr.bf16.mxu0 0
    %1819 = vmatpush1.bf16.msra.mxu0 %v1140
    %1820 = vmatprep.subr.bf16.mxu0 0
    %1821 = vmatpush1.bf16.msra.mxu0 %v1147
    %1822 = vmatprep.subr.bf16.mxu0 0
    %1823 = vmatpush1.bf16.msra.mxu0 %v1154
    %1824 = vmatprep.subr.bf16.mxu0 0
    %1825 = vmatpush1.bf16.msra.mxu0 %v1161
    %1826 = vmatprep.subr.bf16.mxu0 0
    %1827 = vmatpush1.bf16.msra.mxu0 %v1168
    %1828 = vmatprep.subr.bf16.mxu0 0
    %1829 = vmatpush1.bf16.msra.mxu0 %v1175
    %1830 = vmatprep.subr.bf16.mxu0 0
    %1831 = vmatpush1.bf16.msra.mxu0 %v1182
    %1832 = vmatprep.subr.bf16.mxu0 0
    %1833 = vmatpush1.bf16.msra.mxu0 %v1189
    %1834 = vmatprep.subr.bf16.mxu0 0
    %1835 = vmatpush1.bf16.msra.mxu0 %v1196
    %1836 = vmatprep.subr.bf16.mxu0 0
    %1837 = vmatpush1.bf16.msra.mxu0 %v1203
    %1838 = vmatprep.subr.bf16.mxu0 0
    %1839 = vmatpush1.bf16.msra.mxu0 %v1210
    %1840 = vmatprep.subr.bf16.mxu0 0
    %1841 = vmatpush1.bf16.msra.mxu0 %v1217
    %1842 = vmatprep.subr.bf16.mxu0 0
    %1843 = vmatpush1.bf16.msra.mxu0 %v1224
    %1844 = vmatprep.subr.bf16.mxu0 0
    %1845 = vmatpush1.bf16.msra.mxu0 %v1231
    %1846 = vmatprep.mubr.bf16.mxu0 %v120
    %1847 = vmatmul.mubr.bf16.gmra.mrb[0].mxu0 %v119
    %v1848 = vpop.f32.mrb[0].mxu0
    %v1849 = vadd.f32 %v408, %v1848
    %v1850 = vpop.f32.mrb[0].mxu0
    %v1851 = vpop.f32.mrb[0].mxu0
    %v1852 = vpop.f32.mrb[0].mxu0
    %1853 = vdwg.mxu0
    %1854 = vmatprep.subr.bf16.mxu0 0
    %1855 = vmatpush1.bf16.msra.mxu0 %v1238
    %1856 = vmatprep.subr.bf16.mxu0 0
    %1857 = vmatpush1.bf16.msra.mxu0 %v1245
    %1858 = vmatprep.subr.bf16.mxu0 0
    %1859 = vmatpush1.bf16.msra.mxu0 %v1252
    %1860 = vmatprep.subr.bf16.mxu0 0
    %1861 = vmatpush1.bf16.msra.mxu0 %v1259
    %1862 = vmatprep.subr.bf16.mxu0 0
    %1863 = vmatpush1.bf16.msra.mxu0 %v1266
    %1864 = vmatprep.subr.bf16.mxu0 0
    %1865 = vmatpush1.bf16.msra.mxu0 %v1273
    %1866 = vmatprep.subr.bf16.mxu0 0
    %1867 = vmatpush1.bf16.msra.mxu0 %v1280
    %1868 = vmatprep.subr.bf16.mxu0 0
    %1869 = vmatpush1.bf16.msra.mxu0 %v1287
    %1870 = vmatprep.subr.bf16.mxu0 0
    %1871 = vmatpush1.bf16.msra.mxu0 %v1294
    %1872 = vmatprep.subr.bf16.mxu0 0
    %1873 = vmatpush1.bf16.msra.mxu0 %v1301
    %1874 = vmatprep.subr.bf16.mxu0 0
    %1875 = vmatpush1.bf16.msra.mxu0 %v1308
    %1876 = vmatprep.subr.bf16.mxu0 0
    %1877 = vmatpush1.bf16.msra.mxu0 %v1315
    %1878 = vmatprep.subr.bf16.mxu0 0
    %1879 = vmatpush1.bf16.msra.mxu0 %v1322
    %1880 = vmatprep.subr.bf16.mxu0 0
    %1881 = vmatpush1.bf16.msra.mxu0 %v1329
    %1882 = vmatprep.subr.bf16.mxu0 0
    %1883 = vmatpush1.bf16.msra.mxu0 %v1336
    %1884 = vmatprep.subr.bf16.mxu0 0
    %1885 = vmatpush1.bf16.msra.mxu0 %v1343
    %1886 = vmatprep.mubr.bf16.mxu0 %v122
    %1887 = vmatmul.mubr.bf16.gmra.mrb[0].mxu0 %v121
    %v1888 = vpop.f32.mrb[0].mxu0
    %v1889 = vadd.f32 %v1849, %v1888
    %v1890 = vpop.f32.mrb[0].mxu0
    %v1891 = vpop.f32.mrb[0].mxu0
    %v1892 = vpop.f32.mrb[0].mxu0
    %1893 = vdwg.mxu0
    %v1894 = vmul.f32 %v1644, 0.5
    %v1895 = vmul.f32 %v1646, 0.5
    %v1896 = vmul.f32 %v1726, 0.5
    %v1897 = vmul.f32 %v1728, 0.5
    %v1898 = vmul.f32 %v1808, 0.5
    %v1899 = vmul.f32 %v1810, 0.5
    %v1900 = vmul.f32 %v1889, 0.5
    %v1901 = vtanh.pop %v1894
    %v1902 = vtanh.pop %v1895
    %v1903 = vtanh.pop %v1896
    %v1904 = vtanh.pop %v1897
    %v1905 = vtanh.pop %v1898
    %v1906 = vtanh.pop %v1899
    %v1907 = vtanh.pop %v1900
    %v1908 = vadd.f32 %v1901, 1.0
    %v1909 = vadd.f32 %v1902, 1.0
    %v1910 = vadd.f32 %v1903, 1.0
    %v1911 = vadd.f32 %v1904, 1.0
    %v1912 = vadd.f32 %v1905, 1.0
    %v1913 = vadd.f32 %v1906, 1.0
    %v1914 = vadd.f32 %v1907, 1.0
    %v1915 = vmul.f32 %v1908, 0.5
    %v1916 = vmul.f32 %v1909, 0.5
    %v1917 = vmul.f32 %v1910, 0.5
    %v1918 = vmul.f32 %v1911, 0.5
    %v1919 = vmul.f32 %v1912, 0.5
    %v1920 = vmul.f32 %v1913, 0.5
    %v1921 = vmul.f32 %v1914, 0.5
    %1922 = vst [vmem:[#allocation2] sm:$0xff] %v1915
    %1923 = vst [vmem:[#allocation2 + $0x8] sm:$0xff] %v1916
    %1924 = vst [vmem:[#allocation2 + $0x10] sm:$0xff] %v1917
    %1925 = vst [vmem:[#allocation2 + $0x18] sm:$0xff] %v1918
    %1926 = vst [vmem:[#allocation2 + $0x20] sm:$0xff] %v1919
    %1927 = vst [vmem:[#allocation2 + $0x28] sm:$0xff] %v1920
    %vm1928 = vcmask 130048
    %1929 = vst.msk [vmem:[#allocation2 + $0x30] sm:$0xff] %vm1928, %v1921
    // Predicated region
    $region22: #{tpu_custom_call.1} parent=1 // pred_check
      _
    $region23: #{tpu_custom_call.1} parent=1 // pred_check_branch
      %1931 = sbr.rel (0) target = $region25
    $region24: #{tpu_custom_call.1} parent=1 // pred_region
      %s1933 = ssub.s32 896, 896
      %1934 = vsyncadd [#allocation3], %s1933
      %s1936 = sshll.u32 [#allocation2], 4
      %s1937 = int_to_ptr.vmem [resolvable:$true] %s1936
      %1939 = dma.vmem_to_hbm [thread:$0]  %s1937, 896, %s5, [#allocation3]
    $region25: #{tpu_custom_call.1} parent=1 // pred_fallthru
      _
    // Predicated region
    $region26: #{tpu_custom_call.1} parent=1 // pred_check
      _
    $region27: #{tpu_custom_call.1} parent=1 // pred_check_branch
      %1941 = sbr.rel (0) target = $region29
    $region28: #{tpu_custom_call.1} parent=1 // pred_region
      %1942 = dma.done [#allocation3], 896
    $region29: #{tpu_custom_call.1} parent=1 // pred_fallthru
      _
    %1943 = vsyncpa [#allocation3], 1

</llo_original>
